<compile_context>
chip_gen: v7x
topology: tpu7x:2x2x1
jax: 0.10.0
libtpu: 0.0.40
codegen_flags: <defaults>
</compile_context>

<pallas_src>
import jax
import jax.numpy as jnp
import numpy as np
from jax import lax
from jax.experimental import pallas as pl
from jax.experimental.pallas import tpu as pltpu


def _round_up(x, m):
    return ((x + m - 1) // m) * m


def lstm_kernel(gi_ref, h0_ref, c0_ref, whh_ref, wfc_ref, bfc_ref,
                out_ref, hT_ref, cT_ref):
    """Single invocation: unrolled time loop, gates stored as 128-lane slabs.

    gi_ref : (T, Bp, 4*Hp)  precomputed x-projection (+ b_ih + b_hh)
    h0/c0  : (Bp, Hp)
    whh    : (Hp, 4*Hp)     recurrent weights, per-gate lane-aligned slabs
    wfc    : (Hp, Op), bfc: (1, Op)
    out    : (Bp, Op), hT/cT: (Bp, Hp)
    """
    T = gi_ref.shape[0]
    Hp = h0_ref.shape[-1]

    # Load recurrent weights once; reused every step of the serial loop.
    whh = whh_ref[...]

    def step(t, carry):
        h, c = carry
        # Recurrent projection for all 4 gates at once (one MXU matmul).
        gates = gi_ref[t] + jnp.dot(h, whh,
                                    preferred_element_type=jnp.float32)
        # Gate order matches torch.nn.LSTM: i, f, g, o.  Slices are on
        # 128-lane boundaries -> full-vreg, no masking.
        i_g = jax.nn.sigmoid(gates[:, 0 * Hp:1 * Hp])
        f_g = jax.nn.sigmoid(gates[:, 1 * Hp:2 * Hp])
        g_g = jnp.tanh(gates[:, 2 * Hp:3 * Hp])
        o_g = jax.nn.sigmoid(gates[:, 3 * Hp:4 * Hp])
        c_new = f_g * c + i_g * g_g
        h_new = o_g * jnp.tanh(c_new)
        return (h_new, c_new)

    h, c = lax.fori_loop(0, T, step, (h0_ref[...], c0_ref[...]), unroll=True)

    hT_ref[...] = h
    cT_ref[...] = c
    # Final FC on the last hidden state only (weights touched once).
    out_ref[...] = (jnp.dot(h, wfc_ref[...], preferred_element_type=jnp.float32)
                    + bfc_ref[...])


def char_lstm_forward(x, hidden, params):
    """x: (B, T) int32; hidden: (h0, c0) each (1, B, H) f32.

    Returns (logits (B, O), (h_T (1,B,H), c_T (1,B,H))).
    """
    emb_table = params["embedding"]            # (V, H)
    w_ih = params["w_ih"]                      # (4H, H)  torch layout, gates i,f,g,o
    w_hh = params["w_hh"]                      # (4H, H)
    b_ih = params["b_ih"]                      # (4H,)
    b_hh = params["b_hh"]                      # (4H,)
    w_fc = params["w_fc"]                      # (O, H)
    b_fc = params["b_fc"]                      # (O,)

    h0, c0 = hidden
    B, T = x.shape
    H = emb_table.shape[1]
    O = w_fc.shape[0]

    f32 = jnp.float32
    Hp = _round_up(H, 128)                     # lane width per gate slab
    Op = _round_up(O, 128)                     # lane-dense logits store
    Bp = _round_up(B, 8)                       # sublane-aligned batch

    # --- lane-aligned (per-gate slab) weight / bias layouts -----------------
    w_ih_t = w_ih.T.astype(f32)                # (H, 4H)
    w_hh_t = w_hh.T.astype(f32)                # (H, 4H)
    b_comb = (b_ih + b_hh).astype(f32)         # fold both biases together

    w_hh_pad = jnp.zeros((Hp, 4 * Hp), f32)
    w_ih_slab = jnp.zeros((H, 4 * Hp), f32)
    b_slab = jnp.zeros((4 * Hp,), f32)
    for g in range(4):                         # gates i, f, g, o
        w_hh_pad = w_hh_pad.at[:H, g * Hp:g * Hp + H].set(
            w_hh_t[:, g * H:(g + 1) * H])
        w_ih_slab = w_ih_slab.at[:, g * Hp:g * Hp + H].set(
            w_ih_t[:, g * H:(g + 1) * H])
        b_slab = b_slab.at[g * Hp:g * Hp + H].set(b_comb[g * H:(g + 1) * H])

    w_fc_pad = jnp.zeros((Hp, Op), f32).at[:H, :O].set(w_fc.T.astype(f32))
    b_fc_pad = jnp.zeros((1, Op), f32).at[0, :O].set(b_fc.astype(f32))

    # --- input projection for ALL timesteps, fully hoisted ------------------
    # embedding(x) @ W_ih^T + (b_ih + b_hh)  ==  gather(embedding @ W_ih^T + b, x)
    # so we project the (tiny) embedding table ONCE and gather per token.
    # TODO(synk): the token-id gather stays in XLA; it could be fused via a
    # scalar-prefetch + pl.Element row-gather BlockSpec if V were large.
    proj_table = jnp.dot(emb_table.astype(f32), w_ih_slab) + b_slab  # (V, 4Hp)
    gi_tm = jnp.take(proj_table, x.T, axis=0)                        # (T, B, 4Hp)
    gi_all = jnp.zeros((T, Bp, 4 * Hp), f32).at[:, :B, :].set(gi_tm)

    h0p = jnp.zeros((Bp, Hp), f32).at[:B, :H].set(h0[0].astype(f32))
    c0p = jnp.zeros((Bp, Hp), f32).at[:B, :H].set(c0[0].astype(f32))

    vmem_spec = pl.BlockSpec(memory_space=pltpu.MemorySpace.VMEM)

    # Single invocation (no grid): whole working set lives in VMEM for the
    # entire call; the time recurrence runs in-kernel.
    logits_p, hT_p, cT_p = pl.pallas_call(
        lstm_kernel,
        out_shape=(
            jax.ShapeDtypeStruct((Bp, Op), f32),
            jax.ShapeDtypeStruct((Bp, Hp), f32),
            jax.ShapeDtypeStruct((Bp, Hp), f32),
        ),
        in_specs=[vmem_spec] * 6,
        out_specs=(vmem_spec, vmem_spec, vmem_spec),
    )(gi_all, h0p, c0p, w_hh_pad, w_fc_pad, b_fc_pad)

    logits = logits_p[:B, :O]
    h_T = hT_p[:B, :H].reshape(1, B, H)
    c_T = cT_p[:B, :H].reshape(1, B, H)
    return logits, (h_T, c_T)


char_lstm_forward = jax.jit(char_lstm_forward)


def reference_forward(x, hidden, params):
    """Pure-JAX reference mirroring torch.nn.LSTM semantics, for validation."""
    emb = jnp.take(params["embedding"], x, axis=0)   # (B, T, H)
    H = params["embedding"].shape[1]
    w_ih, w_hh = params["w_ih"], params["w_hh"]
    b_ih, b_hh = params["b_ih"], params["b_hh"]
    h0, c0 = hidden

    def step(carry, x_t):
        h, c = carry
        gates = (x_t @ w_ih.T + b_ih) + (h @ w_hh.T + b_hh)
        i_g = jax.nn.sigmoid(gates[:, 0:H])
        f_g = jax.nn.sigmoid(gates[:, H:2 * H])
        g_g = jnp.tanh(gates[:, 2 * H:3 * H])
        o_g = jax.nn.sigmoid(gates[:, 3 * H:4 * H])
        c_new = f_g * c + i_g * g_g
        h_new = o_g * jnp.tanh(c_new)
        return (h_new, c_new), None

    (h_T, c_T), _ = lax.scan(step, (h0[0], c0[0]), jnp.transpose(emb, (1, 0, 2)))
    logits = h_T @ params["w_fc"].T + params["b_fc"]
    return logits, (h_T.reshape(1, *h_T.shape), c_T.reshape(1, *c_T.shape))


def init_params(key, input_size, hidden_size, output_size):
    ks = jax.random.split(key, 7)
    H = hidden_size
    scale = 1.0 / np.sqrt(H)
    return {
        "embedding": jax.random.normal(ks[0], (input_size, H), jnp.float32),
        "w_ih": jax.random.uniform(ks[1], (4 * H, H), jnp.float32, -scale, scale),
        "w_hh": jax.random.uniform(ks[2], (4 * H, H), jnp.float32, -scale, scale),
        "b_ih": jax.random.uniform(ks[3], (4 * H,), jnp.float32, -scale, scale),
        "b_hh": jax.random.uniform(ks[4], (4 * H,), jnp.float32, -scale, scale),
        "w_fc": jax.random.uniform(ks[5], (output_size, H), jnp.float32, -scale, scale),
        "b_fc": jax.random.uniform(ks[6], (output_size,), jnp.float32, -scale, scale),
    }


if __name__ == "__main__":
    INPUT_SIZE = 20     # vocab
    HIDDEN_SIZE = 32
    OUTPUT_SIZE = 16
    B, T = 2, 8

    key = jax.random.PRNGKey(0)
    k_par, k_x = jax.random.split(key)
    params = init_params(k_par, INPUT_SIZE, HIDDEN_SIZE, OUTPUT_SIZE)

    x = jax.random.randint(k_x, (B, T), 0, INPUT_SIZE, dtype=jnp.int32)
    hidden = (jnp.zeros((1, B, HIDDEN_SIZE), jnp.float32),     # init_hidden
              jnp.zeros((1, B, HIDDEN_SIZE), jnp.float32))

    logits, (h_out, c_out) = char_lstm_forward(x, hidden, params)
    logits = jax.block_until_ready(logits)
    h_out = jax.block_until_ready(h_out)
    c_out = jax.block_until_ready(c_out)

    ref_logits, (ref_h, ref_c) = reference_forward(x, hidden, params)

    assert logits.shape == (B, OUTPUT_SIZE)
    assert h_out.shape == (1, B, HIDDEN_SIZE) and c_out.shape == (1, B, HIDDEN_SIZE)
    np.testing.assert_allclose(np.asarray(logits), np.asarray(ref_logits),
                               rtol=1e-4, atol=1e-4)
    np.testing.assert_allclose(np.asarray(h_out), np.asarray(ref_h),
                               rtol=1e-4, atol=1e-4)
    np.testing.assert_allclose(np.asarray(c_out), np.asarray(ref_c),
                               rtol=1e-4, atol=1e-4)
    print("KERNEL_OK")
</pallas_src>

<mosaic_0001>
module attributes {stable_mosaic.version = 11 : i64} {
  func.func @lstm_kernel(%arg0: memref<8x8x512xf32, #tpu.memory_space<vmem>>, %arg1: memref<8x128xf32, #tpu.memory_space<vmem>>, %arg2: memref<8x128xf32, #tpu.memory_space<vmem>>, %arg3: memref<128x512xf32, #tpu.memory_space<vmem>>, %arg4: memref<128x128xf32, #tpu.memory_space<vmem>>, %arg5: memref<1x128xf32, #tpu.memory_space<vmem>>, %arg6: memref<8x128xf32, #tpu.memory_space<vmem>>, %arg7: memref<8x128xf32, #tpu.memory_space<vmem>>, %arg8: memref<8x128xf32, #tpu.memory_space<vmem>>) attributes {dimension_semantics = [], scalar_prefetch = 0 : i64, scratch_operands = 0 : i64, tpu.core_type = #tpu.core_type<tc>} {
    %c0 = arith.constant 0 : index
    %c0_0 = arith.constant 0 : index
    %0 = vector.load %arg3[%c0, %c0_0] : memref<128x512xf32, #tpu.memory_space<vmem>>, vector<128x512xf32>
    %c0_1 = arith.constant 0 : index
    %c0_2 = arith.constant 0 : index
    %1 = vector.load %arg1[%c0_1, %c0_2] : memref<8x128xf32, #tpu.memory_space<vmem>>, vector<8x128xf32>
    %c0_3 = arith.constant 0 : index
    %c0_4 = arith.constant 0 : index
    %2 = vector.load %arg2[%c0_3, %c0_4] : memref<8x128xf32, #tpu.memory_space<vmem>>, vector<8x128xf32>
    %c0_i32 = arith.constant 0 : i32
    %3 = arith.index_cast %c0_i32 : i32 to index
    %c0_5 = arith.constant 0 : index
    %c0_6 = arith.constant 0 : index
    %4 = vector.load %arg0[%3, %c0_5, %c0_6] : memref<8x8x512xf32, #tpu.memory_space<vmem>>, vector<1x8x512xf32>
    %5 = vector.shape_cast %4 : vector<1x8x512xf32> to vector<8x512xf32>
    %cst = arith.constant dense<0.000000e+00> : vector<8x512xf32>
    %6 = tpu.matmul %1, %0, %cst {dimension_numbers = #tpu.dot_dimension_numbers<[1], [0], [0], [1], [0, 0, 1, 1], [], []>} : vector<8x128xf32>, vector<128x512xf32>, vector<8x512xf32> -> vector<8x512xf32>
    %7 = arith.addf %5, %6 : vector<8x512xf32>
    %8 = vector.extract_strided_slice %7 {offsets = [0, 0], sizes = [8, 128], strides = [1, 1]} : vector<8x512xf32> to vector<8x128xf32>
    %9 = arith.negf %8 : vector<8x128xf32>
    %10 = math.exp %9 : vector<8x128xf32>
    %cst_7 = arith.constant 1.000000e+00 : f32
    %11 = vector.broadcast %cst_7 : f32 to vector<8x128xf32>
    %12 = arith.addf %11, %10 : vector<8x128xf32>
    %13 = arith.divf %11, %12 : vector<8x128xf32>
    %14 = vector.extract_strided_slice %7 {offsets = [0, 128], sizes = [8, 128], strides = [1, 1]} : vector<8x512xf32> to vector<8x128xf32>
    %15 = arith.negf %14 : vector<8x128xf32>
    %16 = math.exp %15 : vector<8x128xf32>
    %cst_8 = arith.constant 1.000000e+00 : f32
    %17 = vector.broadcast %cst_8 : f32 to vector<8x128xf32>
    %18 = arith.addf %17, %16 : vector<8x128xf32>
    %19 = arith.divf %17, %18 : vector<8x128xf32>
    %20 = vector.extract_strided_slice %7 {offsets = [0, 256], sizes = [8, 128], strides = [1, 1]} : vector<8x512xf32> to vector<8x128xf32>
    %21 = math.tanh %20 : vector<8x128xf32>
    %22 = vector.extract_strided_slice %7 {offsets = [0, 384], sizes = [8, 128], strides = [1, 1]} : vector<8x512xf32> to vector<8x128xf32>
    %23 = arith.negf %22 : vector<8x128xf32>
    %24 = math.exp %23 : vector<8x128xf32>
    %cst_9 = arith.constant 1.000000e+00 : f32
    %25 = vector.broadcast %cst_9 : f32 to vector<8x128xf32>
    %26 = arith.addf %25, %24 : vector<8x128xf32>
    %27 = arith.divf %25, %26 : vector<8x128xf32>
    %28 = arith.mulf %19, %2 : vector<8x128xf32>
    %29 = arith.mulf %13, %21 : vector<8x128xf32>
    %30 = arith.addf %28, %29 : vector<8x128xf32>
    %31 = math.tanh %30 : vector<8x128xf32>
    %32 = arith.mulf %27, %31 : vector<8x128xf32>
    %c1_i32 = arith.constant 1 : i32
    %33 = arith.index_cast %c1_i32 : i32 to index
    %c0_10 = arith.constant 0 : index
    %c0_11 = arith.constant 0 : index
    %34 = vector.load %arg0[%33, %c0_10, %c0_11] : memref<8x8x512xf32, #tpu.memory_space<vmem>>, vector<1x8x512xf32>
    %35 = vector.shape_cast %34 : vector<1x8x512xf32> to vector<8x512xf32>
    %cst_12 = arith.constant dense<0.000000e+00> : vector<8x512xf32>
    %36 = tpu.matmul %32, %0, %cst_12 {dimension_numbers = #tpu.dot_dimension_numbers<[1], [0], [0], [1], [0, 0, 1, 1], [], []>} : vector<8x128xf32>, vector<128x512xf32>, vector<8x512xf32> -> vector<8x512xf32>
    %37 = arith.addf %35, %36 : vector<8x512xf32>
    %38 = vector.extract_strided_slice %37 {offsets = [0, 0], sizes = [8, 128], strides = [1, 1]} : vector<8x512xf32> to vector<8x128xf32>
    %39 = arith.negf %38 : vector<8x128xf32>
    %40 = math.exp %39 : vector<8x128xf32>
    %cst_13 = arith.constant 1.000000e+00 : f32
    %41 = vector.broadcast %cst_13 : f32 to vector<8x128xf32>
    %42 = arith.addf %41, %40 : vector<8x128xf32>
    %43 = arith.divf %41, %42 : vector<8x128xf32>
    %44 = vector.extract_strided_slice %37 {offsets = [0, 128], sizes = [8, 128], strides = [1, 1]} : vector<8x512xf32> to vector<8x128xf32>
    %45 = arith.negf %44 : vector<8x128xf32>
    %46 = math.exp %45 : vector<8x128xf32>
    %cst_14 = arith.constant 1.000000e+00 : f32
    %47 = vector.broadcast %cst_14 : f32 to vector<8x128xf32>
    %48 = arith.addf %47, %46 : vector<8x128xf32>
    %49 = arith.divf %47, %48 : vector<8x128xf32>
    %50 = vector.extract_strided_slice %37 {offsets = [0, 256], sizes = [8, 128], strides = [1, 1]} : vector<8x512xf32> to vector<8x128xf32>
    %51 = math.tanh %50 : vector<8x128xf32>
    %52 = vector.extract_strided_slice %37 {offsets = [0, 384], sizes = [8, 128], strides = [1, 1]} : vector<8x512xf32> to vector<8x128xf32>
    %53 = arith.negf %52 : vector<8x128xf32>
    %54 = math.exp %53 : vector<8x128xf32>
    %cst_15 = arith.constant 1.000000e+00 : f32
    %55 = vector.broadcast %cst_15 : f32 to vector<8x128xf32>
    %56 = arith.addf %55, %54 : vector<8x128xf32>
    %57 = arith.divf %55, %56 : vector<8x128xf32>
    %58 = arith.mulf %49, %30 : vector<8x128xf32>
    %59 = arith.mulf %43, %51 : vector<8x128xf32>
    %60 = arith.addf %58, %59 : vector<8x128xf32>
    %61 = math.tanh %60 : vector<8x128xf32>
    %62 = arith.mulf %57, %61 : vector<8x128xf32>
    %c2_i32 = arith.constant 2 : i32
    %63 = arith.index_cast %c2_i32 : i32 to index
    %c0_16 = arith.constant 0 : index
    %c0_17 = arith.constant 0 : index
    %64 = vector.load %arg0[%63, %c0_16, %c0_17] : memref<8x8x512xf32, #tpu.memory_space<vmem>>, vector<1x8x512xf32>
    %65 = vector.shape_cast %64 : vector<1x8x512xf32> to vector<8x512xf32>
    %cst_18 = arith.constant dense<0.000000e+00> : vector<8x512xf32>
    %66 = tpu.matmul %62, %0, %cst_18 {dimension_numbers = #tpu.dot_dimension_numbers<[1], [0], [0], [1], [0, 0, 1, 1], [], []>} : vector<8x128xf32>, vector<128x512xf32>, vector<8x512xf32> -> vector<8x512xf32>
    %67 = arith.addf %65, %66 : vector<8x512xf32>
    %68 = vector.extract_strided_slice %67 {offsets = [0, 0], sizes = [8, 128], strides = [1, 1]} : vector<8x512xf32> to vector<8x128xf32>
    %69 = arith.negf %68 : vector<8x128xf32>
    %70 = math.exp %69 : vector<8x128xf32>
    %cst_19 = arith.constant 1.000000e+00 : f32
    %71 = vector.broadcast %cst_19 : f32 to vector<8x128xf32>
    %72 = arith.addf %71, %70 : vector<8x128xf32>
    %73 = arith.divf %71, %72 : vector<8x128xf32>
    %74 = vector.extract_strided_slice %67 {offsets = [0, 128], sizes = [8, 128], strides = [1, 1]} : vector<8x512xf32> to vector<8x128xf32>
    %75 = arith.negf %74 : vector<8x128xf32>
    %76 = math.exp %75 : vector<8x128xf32>
    %cst_20 = arith.constant 1.000000e+00 : f32
    %77 = vector.broadcast %cst_20 : f32 to vector<8x128xf32>
    %78 = arith.addf %77, %76 : vector<8x128xf32>
    %79 = arith.divf %77, %78 : vector<8x128xf32>
    %80 = vector.extract_strided_slice %67 {offsets = [0, 256], sizes = [8, 128], strides = [1, 1]} : vector<8x512xf32> to vector<8x128xf32>
    %81 = math.tanh %80 : vector<8x128xf32>
    %82 = vector.extract_strided_slice %67 {offsets = [0, 384], sizes = [8, 128], strides = [1, 1]} : vector<8x512xf32> to vector<8x128xf32>
    %83 = arith.negf %82 : vector<8x128xf32>
    %84 = math.exp %83 : vector<8x128xf32>
    %cst_21 = arith.constant 1.000000e+00 : f32
    %85 = vector.broadcast %cst_21 : f32 to vector<8x128xf32>
    %86 = arith.addf %85, %84 : vector<8x128xf32>
    %87 = arith.divf %85, %86 : vector<8x128xf32>
    %88 = arith.mulf %79, %60 : vector<8x128xf32>
    %89 = arith.mulf %73, %81 : vector<8x128xf32>
    %90 = arith.addf %88, %89 : vector<8x128xf32>
    %91 = math.tanh %90 : vector<8x128xf32>
    %92 = arith.mulf %87, %91 : vector<8x128xf32>
    %c3_i32 = arith.constant 3 : i32
    %93 = arith.index_cast %c3_i32 : i32 to index
    %c0_22 = arith.constant 0 : index
    %c0_23 = arith.constant 0 : index
    %94 = vector.load %arg0[%93, %c0_22, %c0_23] : memref<8x8x512xf32, #tpu.memory_space<vmem>>, vector<1x8x512xf32>
    %95 = vector.shape_cast %94 : vector<1x8x512xf32> to vector<8x512xf32>
    %cst_24 = arith.constant dense<0.000000e+00> : vector<8x512xf32>
    %96 = tpu.matmul %92, %0, %cst_24 {dimension_numbers = #tpu.dot_dimension_numbers<[1], [0], [0], [1], [0, 0, 1, 1], [], []>} : vector<8x128xf32>, vector<128x512xf32>, vector<8x512xf32> -> vector<8x512xf32>
    %97 = arith.addf %95, %96 : vector<8x512xf32>
    %98 = vector.extract_strided_slice %97 {offsets = [0, 0], sizes = [8, 128], strides = [1, 1]} : vector<8x512xf32> to vector<8x128xf32>
    %99 = arith.negf %98 : vector<8x128xf32>
    %100 = math.exp %99 : vector<8x128xf32>
    %cst_25 = arith.constant 1.000000e+00 : f32
    %101 = vector.broadcast %cst_25 : f32 to vector<8x128xf32>
    %102 = arith.addf %101, %100 : vector<8x128xf32>
    %103 = arith.divf %101, %102 : vector<8x128xf32>
    %104 = vector.extract_strided_slice %97 {offsets = [0, 128], sizes = [8, 128], strides = [1, 1]} : vector<8x512xf32> to vector<8x128xf32>
    %105 = arith.negf %104 : vector<8x128xf32>
    %106 = math.exp %105 : vector<8x128xf32>
    %cst_26 = arith.constant 1.000000e+00 : f32
    %107 = vector.broadcast %cst_26 : f32 to vector<8x128xf32>
    %108 = arith.addf %107, %106 : vector<8x128xf32>
    %109 = arith.divf %107, %108 : vector<8x128xf32>
    %110 = vector.extract_strided_slice %97 {offsets = [0, 256], sizes = [8, 128], strides = [1, 1]} : vector<8x512xf32> to vector<8x128xf32>
    %111 = math.tanh %110 : vector<8x128xf32>
    %112 = vector.extract_strided_slice %97 {offsets = [0, 384], sizes = [8, 128], strides = [1, 1]} : vector<8x512xf32> to vector<8x128xf32>
    %113 = arith.negf %112 : vector<8x128xf32>
    %114 = math.exp %113 : vector<8x128xf32>
    %cst_27 = arith.constant 1.000000e+00 : f32
    %115 = vector.broadcast %cst_27 : f32 to vector<8x128xf32>
    %116 = arith.addf %115, %114 : vector<8x128xf32>
    %117 = arith.divf %115, %116 : vector<8x128xf32>
    %118 = arith.mulf %109, %90 : vector<8x128xf32>
    %119 = arith.mulf %103, %111 : vector<8x128xf32>
    %120 = arith.addf %118, %119 : vector<8x128xf32>
    %121 = math.tanh %120 : vector<8x128xf32>
    %122 = arith.mulf %117, %121 : vector<8x128xf32>
    %c4_i32 = arith.constant 4 : i32
    %123 = arith.index_cast %c4_i32 : i32 to index
    %c0_28 = arith.constant 0 : index
    %c0_29 = arith.constant 0 : index
    %124 = vector.load %arg0[%123, %c0_28, %c0_29] : memref<8x8x512xf32, #tpu.memory_space<vmem>>, vector<1x8x512xf32>
    %125 = vector.shape_cast %124 : vector<1x8x512xf32> to vector<8x512xf32>
    %cst_30 = arith.constant dense<0.000000e+00> : vector<8x512xf32>
    %126 = tpu.matmul %122, %0, %cst_30 {dimension_numbers = #tpu.dot_dimension_numbers<[1], [0], [0], [1], [0, 0, 1, 1], [], []>} : vector<8x128xf32>, vector<128x512xf32>, vector<8x512xf32> -> vector<8x512xf32>
    %127 = arith.addf %125, %126 : vector<8x512xf32>
    %128 = vector.extract_strided_slice %127 {offsets = [0, 0], sizes = [8, 128], strides = [1, 1]} : vector<8x512xf32> to vector<8x128xf32>
    %129 = arith.negf %128 : vector<8x128xf32>
    %130 = math.exp %129 : vector<8x128xf32>
    %cst_31 = arith.constant 1.000000e+00 : f32
    %131 = vector.broadcast %cst_31 : f32 to vector<8x128xf32>
    %132 = arith.addf %131, %130 : vector<8x128xf32>
    %133 = arith.divf %131, %132 : vector<8x128xf32>
    %134 = vector.extract_strided_slice %127 {offsets = [0, 128], sizes = [8, 128], strides = [1, 1]} : vector<8x512xf32> to vector<8x128xf32>
    %135 = arith.negf %134 : vector<8x128xf32>
    %136 = math.exp %135 : vector<8x128xf32>
    %cst_32 = arith.constant 1.000000e+00 : f32
    %137 = vector.broadcast %cst_32 : f32 to vector<8x128xf32>
    %138 = arith.addf %137, %136 : vector<8x128xf32>
    %139 = arith.divf %137, %138 : vector<8x128xf32>
    %140 = vector.extract_strided_slice %127 {offsets = [0, 256], sizes = [8, 128], strides = [1, 1]} : vector<8x512xf32> to vector<8x128xf32>
    %141 = math.tanh %140 : vector<8x128xf32>
    %142 = vector.extract_strided_slice %127 {offsets = [0, 384], sizes = [8, 128], strides = [1, 1]} : vector<8x512xf32> to vector<8x128xf32>
    %143 = arith.negf %142 : vector<8x128xf32>
    %144 = math.exp %143 : vector<8x128xf32>
    %cst_33 = arith.constant 1.000000e+00 : f32
    %145 = vector.broadcast %cst_33 : f32 to vector<8x128xf32>
    %146 = arith.addf %145, %144 : vector<8x128xf32>
    %147 = arith.divf %145, %146 : vector<8x128xf32>
    %148 = arith.mulf %139, %120 : vector<8x128xf32>
    %149 = arith.mulf %133, %141 : vector<8x128xf32>
    %150 = arith.addf %148, %149 : vector<8x128xf32>
    %151 = math.tanh %150 : vector<8x128xf32>
    %152 = arith.mulf %147, %151 : vector<8x128xf32>
    %c5_i32 = arith.constant 5 : i32
    %153 = arith.index_cast %c5_i32 : i32 to index
    %c0_34 = arith.constant 0 : index
    %c0_35 = arith.constant 0 : index
    %154 = vector.load %arg0[%153, %c0_34, %c0_35] : memref<8x8x512xf32, #tpu.memory_space<vmem>>, vector<1x8x512xf32>
    %155 = vector.shape_cast %154 : vector<1x8x512xf32> to vector<8x512xf32>
    %cst_36 = arith.constant dense<0.000000e+00> : vector<8x512xf32>
    %156 = tpu.matmul %152, %0, %cst_36 {dimension_numbers = #tpu.dot_dimension_numbers<[1], [0], [0], [1], [0, 0, 1, 1], [], []>} : vector<8x128xf32>, vector<128x512xf32>, vector<8x512xf32> -> vector<8x512xf32>
    %157 = arith.addf %155, %156 : vector<8x512xf32>
    %158 = vector.extract_strided_slice %157 {offsets = [0, 0], sizes = [8, 128], strides = [1, 1]} : vector<8x512xf32> to vector<8x128xf32>
    %159 = arith.negf %158 : vector<8x128xf32>
    %160 = math.exp %159 : vector<8x128xf32>
    %cst_37 = arith.constant 1.000000e+00 : f32
    %161 = vector.broadcast %cst_37 : f32 to vector<8x128xf32>
    %162 = arith.addf %161, %160 : vector<8x128xf32>
    %163 = arith.divf %161, %162 : vector<8x128xf32>
    %164 = vector.extract_strided_slice %157 {offsets = [0, 128], sizes = [8, 128], strides = [1, 1]} : vector<8x512xf32> to vector<8x128xf32>
    %165 = arith.negf %164 : vector<8x128xf32>
    %166 = math.exp %165 : vector<8x128xf32>
    %cst_38 = arith.constant 1.000000e+00 : f32
    %167 = vector.broadcast %cst_38 : f32 to vector<8x128xf32>
    %168 = arith.addf %167, %166 : vector<8x128xf32>
    %169 = arith.divf %167, %168 : vector<8x128xf32>
    %170 = vector.extract_strided_slice %157 {offsets = [0, 256], sizes = [8, 128], strides = [1, 1]} : vector<8x512xf32> to vector<8x128xf32>
    %171 = math.tanh %170 : vector<8x128xf32>
    %172 = vector.extract_strided_slice %157 {offsets = [0, 384], sizes = [8, 128], strides = [1, 1]} : vector<8x512xf32> to vector<8x128xf32>
    %173 = arith.negf %172 : vector<8x128xf32>
    %174 = math.exp %173 : vector<8x128xf32>
    %cst_39 = arith.constant 1.000000e+00 : f32
    %175 = vector.broadcast %cst_39 : f32 to vector<8x128xf32>
    %176 = arith.addf %175, %174 : vector<8x128xf32>
    %177 = arith.divf %175, %176 : vector<8x128xf32>
    %178 = arith.mulf %169, %150 : vector<8x128xf32>
    %179 = arith.mulf %163, %171 : vector<8x128xf32>
    %180 = arith.addf %178, %179 : vector<8x128xf32>
    %181 = math.tanh %180 : vector<8x128xf32>
    %182 = arith.mulf %177, %181 : vector<8x128xf32>
    %c6_i32 = arith.constant 6 : i32
    %183 = arith.index_cast %c6_i32 : i32 to index
    %c0_40 = arith.constant 0 : index
    %c0_41 = arith.constant 0 : index
    %184 = vector.load %arg0[%183, %c0_40, %c0_41] : memref<8x8x512xf32, #tpu.memory_space<vmem>>, vector<1x8x512xf32>
    %185 = vector.shape_cast %184 : vector<1x8x512xf32> to vector<8x512xf32>
    %cst_42 = arith.constant dense<0.000000e+00> : vector<8x512xf32>
    %186 = tpu.matmul %182, %0, %cst_42 {dimension_numbers = #tpu.dot_dimension_numbers<[1], [0], [0], [1], [0, 0, 1, 1], [], []>} : vector<8x128xf32>, vector<128x512xf32>, vector<8x512xf32> -> vector<8x512xf32>
    %187 = arith.addf %185, %186 : vector<8x512xf32>
    %188 = vector.extract_strided_slice %187 {offsets = [0, 0], sizes = [8, 128], strides = [1, 1]} : vector<8x512xf32> to vector<8x128xf32>
    %189 = arith.negf %188 : vector<8x128xf32>
    %190 = math.exp %189 : vector<8x128xf32>
    %cst_43 = arith.constant 1.000000e+00 : f32
    %191 = vector.broadcast %cst_43 : f32 to vector<8x128xf32>
    %192 = arith.addf %191, %190 : vector<8x128xf32>
    %193 = arith.divf %191, %192 : vector<8x128xf32>
    %194 = vector.extract_strided_slice %187 {offsets = [0, 128], sizes = [8, 128], strides = [1, 1]} : vector<8x512xf32> to vector<8x128xf32>
    %195 = arith.negf %194 : vector<8x128xf32>
    %196 = math.exp %195 : vector<8x128xf32>
    %cst_44 = arith.constant 1.000000e+00 : f32
    %197 = vector.broadcast %cst_44 : f32 to vector<8x128xf32>
    %198 = arith.addf %197, %196 : vector<8x128xf32>
    %199 = arith.divf %197, %198 : vector<8x128xf32>
    %200 = vector.extract_strided_slice %187 {offsets = [0, 256], sizes = [8, 128], strides = [1, 1]} : vector<8x512xf32> to vector<8x128xf32>
    %201 = math.tanh %200 : vector<8x128xf32>
    %202 = vector.extract_strided_slice %187 {offsets = [0, 384], sizes = [8, 128], strides = [1, 1]} : vector<8x512xf32> to vector<8x128xf32>
    %203 = arith.negf %202 : vector<8x128xf32>
    %204 = math.exp %203 : vector<8x128xf32>
    %cst_45 = arith.constant 1.000000e+00 : f32
    %205 = vector.broadcast %cst_45 : f32 to vector<8x128xf32>
    %206 = arith.addf %205, %204 : vector<8x128xf32>
    %207 = arith.divf %205, %206 : vector<8x128xf32>
    %208 = arith.mulf %199, %180 : vector<8x128xf32>
    %209 = arith.mulf %193, %201 : vector<8x128xf32>
    %210 = arith.addf %208, %209 : vector<8x128xf32>
    %211 = math.tanh %210 : vector<8x128xf32>
    %212 = arith.mulf %207, %211 : vector<8x128xf32>
    %c7_i32 = arith.constant 7 : i32
    %213 = arith.index_cast %c7_i32 : i32 to index
    %c0_46 = arith.constant 0 : index
    %c0_47 = arith.constant 0 : index
    %214 = vector.load %arg0[%213, %c0_46, %c0_47] : memref<8x8x512xf32, #tpu.memory_space<vmem>>, vector<1x8x512xf32>
    %215 = vector.shape_cast %214 : vector<1x8x512xf32> to vector<8x512xf32>
    %cst_48 = arith.constant dense<0.000000e+00> : vector<8x512xf32>
    %216 = tpu.matmul %212, %0, %cst_48 {dimension_numbers = #tpu.dot_dimension_numbers<[1], [0], [0], [1], [0, 0, 1, 1], [], []>} : vector<8x128xf32>, vector<128x512xf32>, vector<8x512xf32> -> vector<8x512xf32>
    %217 = arith.addf %215, %216 : vector<8x512xf32>
    %218 = vector.extract_strided_slice %217 {offsets = [0, 0], sizes = [8, 128], strides = [1, 1]} : vector<8x512xf32> to vector<8x128xf32>
    %219 = arith.negf %218 : vector<8x128xf32>
    %220 = math.exp %219 : vector<8x128xf32>
    %cst_49 = arith.constant 1.000000e+00 : f32
    %221 = vector.broadcast %cst_49 : f32 to vector<8x128xf32>
    %222 = arith.addf %221, %220 : vector<8x128xf32>
    %223 = arith.divf %221, %222 : vector<8x128xf32>
    %224 = vector.extract_strided_slice %217 {offsets = [0, 128], sizes = [8, 128], strides = [1, 1]} : vector<8x512xf32> to vector<8x128xf32>
    %225 = arith.negf %224 : vector<8x128xf32>
    %226 = math.exp %225 : vector<8x128xf32>
    %cst_50 = arith.constant 1.000000e+00 : f32
    %227 = vector.broadcast %cst_50 : f32 to vector<8x128xf32>
    %228 = arith.addf %227, %226 : vector<8x128xf32>
    %229 = arith.divf %227, %228 : vector<8x128xf32>
    %230 = vector.extract_strided_slice %217 {offsets = [0, 256], sizes = [8, 128], strides = [1, 1]} : vector<8x512xf32> to vector<8x128xf32>
    %231 = math.tanh %230 : vector<8x128xf32>
    %232 = vector.extract_strided_slice %217 {offsets = [0, 384], sizes = [8, 128], strides = [1, 1]} : vector<8x512xf32> to vector<8x128xf32>
    %233 = arith.negf %232 : vector<8x128xf32>
    %234 = math.exp %233 : vector<8x128xf32>
    %cst_51 = arith.constant 1.000000e+00 : f32
    %235 = vector.broadcast %cst_51 : f32 to vector<8x128xf32>
    %236 = arith.addf %235, %234 : vector<8x128xf32>
    %237 = arith.divf %235, %236 : vector<8x128xf32>
    %238 = arith.mulf %229, %210 : vector<8x128xf32>
    %239 = arith.mulf %223, %231 : vector<8x128xf32>
    %240 = arith.addf %238, %239 : vector<8x128xf32>
    %241 = math.tanh %240 : vector<8x128xf32>
    %242 = arith.mulf %237, %241 : vector<8x128xf32>
    %c8_i32 = arith.constant 8 : i32
    %c0_52 = arith.constant 0 : index
    %c0_53 = arith.constant 0 : index
    %243 = vector.load %arg7[%c0_52, %c0_53] : memref<8x128xf32, #tpu.memory_space<vmem>>, vector<8x128xf32>
    tpu.vector_store %arg7[%c0_52, %c0_53], %242 {strides = array<i32>} : memref<8x128xf32, #tpu.memory_space<vmem>>, vector<8x128xf32>,
    %c0_54 = arith.constant 0 : index
    %c0_55 = arith.constant 0 : index
    %244 = vector.load %arg8[%c0_54, %c0_55] : memref<8x128xf32, #tpu.memory_space<vmem>>, vector<8x128xf32>
    tpu.vector_store %arg8[%c0_54, %c0_55], %240 {strides = array<i32>} : memref<8x128xf32, #tpu.memory_space<vmem>>, vector<8x128xf32>,
    %c0_56 = arith.constant 0 : index
    %c0_57 = arith.constant 0 : index
    %245 = vector.load %arg4[%c0_56, %c0_57] : memref<128x128xf32, #tpu.memory_space<vmem>>, vector<128x128xf32>
    %cst_58 = arith.constant dense<0.000000e+00> : vector<8x128xf32>
    %246 = tpu.matmul %242, %245, %cst_58 {dimension_numbers = #tpu.dot_dimension_numbers<[1], [0], [0], [1], [0, 0, 1, 1], [], []>} : vector<8x128xf32>, vector<128x128xf32>, vector<8x128xf32> -> vector<8x128xf32>
    %c0_59 = arith.constant 0 : index
    %c0_60 = arith.constant 0 : index
    %247 = vector.load %arg5[%c0_59, %c0_60] : memref<1x128xf32, #tpu.memory_space<vmem>>, vector<1x128xf32>
    %248 = vector.broadcast %247 : vector<1x128xf32> to vector<8x128xf32>
    %249 = arith.addf %246, %248 : vector<8x128xf32>
    %c0_61 = arith.constant 0 : index
    %c0_62 = arith.constant 0 : index
    %250 = vector.load %arg6[%c0_61, %c0_62] : memref<8x128xf32, #tpu.memory_space<vmem>>, vector<8x128xf32>
    tpu.vector_store %arg6[%c0_61, %c0_62], %249 {strides = array<i32>} : memref<8x128xf32, #tpu.memory_space<vmem>>, vector<8x128xf32>,
    return
  }
}

</mosaic_0001>

<llo_original>
// kernel: char_lstm_forward.1
$region0: #{char_lstm_forward.1}
  #allocation0 [shape = 'u32[]', space=smem, size = 0x4, offset = 0x4, fixed_abs, tag = 'smem constant byte address 0x4 - core index']
  #allocation1 [shape = 'u32[144,128]{1,0:T(1,128)}', space=vmem, size = 0x12000, scoped, tag = 'internal scratch']
  %s0 = inlined_call_operand.vmem [shape: f32[8,8,512], index: 0, kind: input, shape index: {}]
  %s1 = inlined_call_operand.vmem [shape: f32[8,128], index: 1, kind: input, shape index: {}]
  %s2 = inlined_call_operand.vmem [shape: f32[8,128], index: 2, kind: input, shape index: {}]
  %s3 = inlined_call_operand.vmem [shape: f32[128,512], index: 3, kind: input, shape index: {}]
  %s4 = inlined_call_operand.vmem [shape: f32[128,128], index: 4, kind: input, shape index: {}]
  %s5 = inlined_call_operand.vmem [shape: f32[1,128], index: 5, kind: input, shape index: {}]
  %s6 = inlined_call_operand.vmem [shape: f32[8,128], index: 6, kind: output, shape index: {0}]
  %s7 = inlined_call_operand.vmem [shape: f32[8,128], index: 7, kind: output, shape index: {1}]
  %s8 = inlined_call_operand.vmem [shape: f32[8,128], index: 8, kind: output, shape index: {2}]
  %9 = xla_tuple %s6, %s7, %s8
  %s10 = sld [smem:[#allocation0]]
  $region50: #{char_lstm_forward.1} parent=0
    _
  %s12 = ssub.s32 1, %s10
  %s13 = scalar_select 0, %s12, %s10
  // Predicated region
  $region2: #{char_lstm_forward.1} parent=0 // pred_check
    _
  $region3: #{char_lstm_forward.1} parent=0 // pred_check_branch
    %15 = sbr.rel (0) target = $region5
  $region4: #{char_lstm_forward.1} parent=0 // pred_region
    _
  $region5: #{char_lstm_forward.1} parent=0 // pred_fallthru
    _
  // Predicated region
  $region6: #{char_lstm_forward.1} parent=0 // pred_check
    _
  $region7: #{char_lstm_forward.1} parent=0 // pred_check_branch
    %17 = sbr.rel (0) target = $region9
  $region8: #{char_lstm_forward.1} parent=0 // pred_region
    _
  $region9: #{char_lstm_forward.1} parent=0 // pred_fallthru
    _
  // Predicated region
  $region10: #{char_lstm_forward.1} parent=0 // pred_check
    _
  $region11: #{char_lstm_forward.1} parent=0 // pred_check_branch
    %19 = sbr.rel (0) target = $region13
  $region12: #{char_lstm_forward.1} parent=0 // pred_region
    _
  $region13: #{char_lstm_forward.1} parent=0 // pred_fallthru
    _
  // Predicated region
  $region14: #{char_lstm_forward.1} parent=0 // pred_check
    _
  $region15: #{char_lstm_forward.1} parent=0 // pred_check_branch
    %21 = sbr.rel (0) target = $region17
  $region16: #{char_lstm_forward.1} parent=0 // pred_region
    _
  $region17: #{char_lstm_forward.1} parent=0 // pred_fallthru
    _
  // Predicated region
  $region18: #{char_lstm_forward.1} parent=0 // pred_check
    _
  $region19: #{char_lstm_forward.1} parent=0 // pred_check_branch
    %23 = sbr.rel (0) target = $region21
  $region20: #{char_lstm_forward.1} parent=0 // pred_region
    _
  $region21: #{char_lstm_forward.1} parent=0 // pred_fallthru
    _
  // Predicated region
  $region22: #{char_lstm_forward.1} parent=0 // pred_check
    _
  $region23: #{char_lstm_forward.1} parent=0 // pred_check_branch
    %25 = sbr.rel (0) target = $region25
  $region24: #{char_lstm_forward.1} parent=0 // pred_region
    _
  $region25: #{char_lstm_forward.1} parent=0 // pred_fallthru
    _
  %v26 = vld [vmem:[%s3] sm:$0xff]
  %v27 = vld [vmem:[%s3 + $0x8] sm:$0xff]
  %v28 = vld [vmem:[%s3 + $0x10] sm:$0xff]
  %v29 = vld [vmem:[%s3 + $0x18] sm:$0xff]
  %v30 = vld [vmem:[%s3 + $0x20] sm:$0xff]
  %v31 = vld [vmem:[%s3 + $0x28] sm:$0xff]
  %v32 = vld [vmem:[%s3 + $0x30] sm:$0xff]
  %v33 = vld [vmem:[%s3 + $0x38] sm:$0xff]
  %v34 = vld [vmem:[%s3 + $0x40] sm:$0xff]
  %v35 = vld [vmem:[%s3 + $0x48] sm:$0xff]
  %v36 = vld [vmem:[%s3 + $0x50] sm:$0xff]
  %v37 = vld [vmem:[%s3 + $0x58] sm:$0xff]
  %v38 = vld [vmem:[%s3 + $0x60] sm:$0xff]
  %v39 = vld [vmem:[%s3 + $0x68] sm:$0xff]
  %v40 = vld [vmem:[%s3 + $0x70] sm:$0xff]
  %v41 = vld [vmem:[%s3 + $0x78] sm:$0xff]
  %v42 = vld [vmem:[%s3 + $0x80] sm:$0xff]
  %v43 = vld [vmem:[%s3 + $0x88] sm:$0xff]
  %v44 = vld [vmem:[%s3 + $0x90] sm:$0xff]
  %v45 = vld [vmem:[%s3 + $0x98] sm:$0xff]
  %v46 = vld [vmem:[%s3 + $0xa0] sm:$0xff]
  %v47 = vld [vmem:[%s3 + $0xa8] sm:$0xff]
  %v48 = vld [vmem:[%s3 + $0xb0] sm:$0xff]
  %v49 = vld [vmem:[%s3 + $0xb8] sm:$0xff]
  %v50 = vld [vmem:[%s3 + $0xc0] sm:$0xff]
  %v51 = vld [vmem:[%s3 + $0xc8] sm:$0xff]
  %v52 = vld [vmem:[%s3 + $0xd0] sm:$0xff]
  %v53 = vld [vmem:[%s3 + $0xd8] sm:$0xff]
  %v54 = vld [vmem:[%s3 + $0xe0] sm:$0xff]
  %v55 = vld [vmem:[%s3 + $0xe8] sm:$0xff]
  %v56 = vld [vmem:[%s3 + $0xf0] sm:$0xff]
  %v57 = vld [vmem:[%s3 + $0xf8] sm:$0xff]
  %v58 = vld [vmem:[%s3 + $0x100] sm:$0xff]
  %v59 = vld [vmem:[%s3 + $0x108] sm:$0xff]
  %v60 = vld [vmem:[%s3 + $0x110] sm:$0xff]
  %v61 = vld [vmem:[%s3 + $0x118] sm:$0xff]
  %v62 = vld [vmem:[%s3 + $0x120] sm:$0xff]
  %v63 = vld [vmem:[%s3 + $0x128] sm:$0xff]
  %v64 = vld [vmem:[%s3 + $0x130] sm:$0xff]
  %v65 = vld [vmem:[%s3 + $0x138] sm:$0xff]
  %v66 = vld [vmem:[%s3 + $0x140] sm:$0xff]
  %v67 = vld [vmem:[%s3 + $0x148] sm:$0xff]
  %v68 = vld [vmem:[%s3 + $0x150] sm:$0xff]
  %v69 = vld [vmem:[%s3 + $0x158] sm:$0xff]
  %v70 = vld [vmem:[%s3 + $0x160] sm:$0xff]
  %v71 = vld [vmem:[%s3 + $0x168] sm:$0xff]
  %v72 = vld [vmem:[%s3 + $0x170] sm:$0xff]
  %v73 = vld [vmem:[%s3 + $0x178] sm:$0xff]
  %v74 = vld [vmem:[%s3 + $0x180] sm:$0xff]
  %v75 = vld [vmem:[%s3 + $0x188] sm:$0xff]
  %v76 = vld [vmem:[%s3 + $0x190] sm:$0xff]
  %v77 = vld [vmem:[%s3 + $0x198] sm:$0xff]
  %v78 = vld [vmem:[%s3 + $0x1a0] sm:$0xff]
  %v79 = vld [vmem:[%s3 + $0x1a8] sm:$0xff]
  %v80 = vld [vmem:[%s3 + $0x1b0] sm:$0xff]
  %v81 = vld [vmem:[%s3 + $0x1b8] sm:$0xff]
  %v82 = vld [vmem:[%s3 + $0x1c0] sm:$0xff]
  %v83 = vld [vmem:[%s3 + $0x1c8] sm:$0xff]
  %v84 = vld [vmem:[%s3 + $0x1d0] sm:$0xff]
  %v85 = vld [vmem:[%s3 + $0x1d8] sm:$0xff]
  %v86 = vld [vmem:[%s3 + $0x1e0] sm:$0xff]
  %v87 = vld [vmem:[%s3 + $0x1e8] sm:$0xff]
  %v88 = vld [vmem:[%s3 + $0x1f0] sm:$0xff]
  %v89 = vld [vmem:[%s3 + $0x1f8] sm:$0xff]
  %v90 = vld [vmem:[%s1] sm:$0xff]
  %v91 = vld [vmem:[%s2] sm:$0xff]
  %v92 = vld [vmem:[%s0] sm:$0xff]
  %v93 = vld [vmem:[%s0 + $0x8] sm:$0xff]
  %v94 = vld [vmem:[%s0 + $0x10] sm:$0xff]
  %v95 = vld [vmem:[%s0 + $0x18] sm:$0xff]
  %96 = vmatprep.subr.mxu0 %v27
  %97 = vmatpush1.msra.mxu0 %v26
  %98 = vmatprep.subr.mxu0 %v31
  %99 = vmatpush1.msra.mxu0 %v30
  %100 = vmatprep.subr.mxu0 %v35
  %101 = vmatpush1.msra.mxu0 %v34
  %102 = vmatprep.subr.mxu0 %v39
  %103 = vmatpush1.msra.mxu0 %v38
  %104 = vmatprep.subr.mxu0 %v43
  %105 = vmatpush1.msra.mxu0 %v42
  %106 = vmatprep.subr.mxu0 %v47
  %107 = vmatpush1.msra.mxu0 %v46
  %108 = vmatprep.subr.mxu0 %v51
  %109 = vmatpush1.msra.mxu0 %v50
  %110 = vmatprep.subr.mxu0 %v55
  %111 = vmatpush1.msra.mxu0 %v54
  %112 = vmatprep.subr.mxu0 %v59
  %113 = vmatpush1.msra.mxu0 %v58
  %114 = vmatprep.subr.mxu0 %v63
  %115 = vmatpush1.msra.mxu0 %v62
  %116 = vmatprep.subr.mxu0 %v67
  %117 = vmatpush1.msra.mxu0 %v66
  %118 = vmatprep.subr.mxu0 %v71
  %119 = vmatpush1.msra.mxu0 %v70
  %120 = vmatprep.subr.mxu0 %v75
  %121 = vmatpush1.msra.mxu0 %v74
  %122 = vmatprep.subr.mxu0 %v79
  %123 = vmatpush1.msra.mxu0 %v78
  %124 = vmatprep.subr.mxu0 %v83
  %125 = vmatpush1.msra.mxu0 %v82
  %126 = vmatprep.subr.mxu0 %v87
  %127 = vmatpush1.msra.mxu0 %v86
  %128 = vmatprep.subr.mxu0 0.0
  %129 = vmatpush1.msra.mxu0 0.0
  %130 = vmatprep.subr.mxu0 0.0
  %131 = vmatpush1.msra.mxu0 0.0
  %132 = vmatprep.subr.mxu0 0.0
  %133 = vmatpush1.msra.mxu0 0.0
  %134 = vmatprep.subr.mxu0 0.0
  %135 = vmatpush1.msra.mxu0 0.0
  %136 = vmatprep.subr.mxu0 0.0
  %137 = vmatpush1.msra.mxu0 0.0
  %138 = vmatprep.subr.mxu0 0.0
  %139 = vmatpush1.msra.mxu0 0.0
  %140 = vmatprep.subr.mxu0 0.0
  %141 = vmatpush1.msra.mxu0 0.0
  %142 = vmatprep.subr.mxu0 0.0
  %143 = vmatpush1.msra.mxu0 0.0
  %144 = vmatprep.subr.mxu0 0.0
  %145 = vmatpush1.msra.mxu0 0.0
  %146 = vmatprep.subr.mxu0 0.0
  %147 = vmatpush1.msra.mxu0 0.0
  %148 = vmatprep.subr.mxu0 0.0
  %149 = vmatpush1.msra.mxu0 0.0
  %150 = vmatprep.subr.mxu0 0.0
  %151 = vmatpush1.msra.mxu0 0.0
  %152 = vmatprep.subr.mxu0 0.0
  %153 = vmatpush1.msra.mxu0 0.0
  %154 = vmatprep.subr.mxu0 0.0
  %155 = vmatpush1.msra.mxu0 0.0
  %156 = vmatprep.subr.mxu0 0.0
  %157 = vmatpush1.msra.mxu0 0.0
  %158 = vmatprep.subr.mxu0 0.0
  %159 = vmatpush1.msra.mxu0 0.0
  %160 = vmatprep.mubr.f32.mxu0 0.0
  %161 = vmatmul.mubr.f32.gmra.mrb[0].mxu0 %v90
  %v162 = vpop.f32.mrb[0].mxu0
  %v163 = vadd.f32 0.0, %v162
  %v164 = vpop.f32.mrb[0].mxu0
  %v165 = vadd.f32 0.0, %v164
  %166 = vdwg.mxu0
  %167 = vmatprep.subr.mxu0 %v29
  %168 = vmatpush1.msra.mxu0 %v28
  %169 = vmatprep.subr.mxu0 %v33
  %170 = vmatpush1.msra.mxu0 %v32
  %171 = vmatprep.subr.mxu0 %v37
  %172 = vmatpush1.msra.mxu0 %v36
  %173 = vmatprep.subr.mxu0 %v41
  %174 = vmatpush1.msra.mxu0 %v40
  %175 = vmatprep.subr.mxu0 %v45
  %176 = vmatpush1.msra.mxu0 %v44
  %177 = vmatprep.subr.mxu0 %v49
  %178 = vmatpush1.msra.mxu0 %v48
  %179 = vmatprep.subr.mxu0 %v53
  %180 = vmatpush1.msra.mxu0 %v52
  %181 = vmatprep.subr.mxu0 %v57
  %182 = vmatpush1.msra.mxu0 %v56
  %183 = vmatprep.subr.mxu0 %v61
  %184 = vmatpush1.msra.mxu0 %v60
  %185 = vmatprep.subr.mxu0 %v65
  %186 = vmatpush1.msra.mxu0 %v64
  %187 = vmatprep.subr.mxu0 %v69
  %188 = vmatpush1.msra.mxu0 %v68
  %189 = vmatprep.subr.mxu0 %v73
  %190 = vmatpush1.msra.mxu0 %v72
  %191 = vmatprep.subr.mxu0 %v77
  %192 = vmatpush1.msra.mxu0 %v76
  %193 = vmatprep.subr.mxu0 %v81
  %194 = vmatpush1.msra.mxu0 %v80
  %195 = vmatprep.subr.mxu0 %v85
  %196 = vmatpush1.msra.mxu0 %v84
  %197 = vmatprep.subr.mxu0 %v89
  %198 = vmatpush1.msra.mxu0 %v88
  %199 = vmatprep.subr.mxu0 0.0
  %200 = vmatpush1.msra.mxu0 0.0
  %201 = vmatprep.subr.mxu0 0.0
  %202 = vmatpush1.msra.mxu0 0.0
  %203 = vmatprep.subr.mxu0 0.0
  %204 = vmatpush1.msra.mxu0 0.0
  %205 = vmatprep.subr.mxu0 0.0
  %206 = vmatpush1.msra.mxu0 0.0
  %207 = vmatprep.subr.mxu0 0.0
  %208 = vmatpush1.msra.mxu0 0.0
  %209 = vmatprep.subr.mxu0 0.0
  %210 = vmatpush1.msra.mxu0 0.0
  %211 = vmatprep.subr.mxu0 0.0
  %212 = vmatpush1.msra.mxu0 0.0
  %213 = vmatprep.subr.mxu0 0.0
  %214 = vmatpush1.msra.mxu0 0.0
  %215 = vmatprep.subr.mxu0 0.0
  %216 = vmatpush1.msra.mxu0 0.0
  %217 = vmatprep.subr.mxu0 0.0
  %218 = vmatpush1.msra.mxu0 0.0
  %219 = vmatprep.subr.mxu0 0.0
  %220 = vmatpush1.msra.mxu0 0.0
  %221 = vmatprep.subr.mxu0 0.0
  %222 = vmatpush1.msra.mxu0 0.0
  %223 = vmatprep.subr.mxu0 0.0
  %224 = vmatpush1.msra.mxu0 0.0
  %225 = vmatprep.subr.mxu0 0.0
  %226 = vmatpush1.msra.mxu0 0.0
  %227 = vmatprep.subr.mxu0 0.0
  %228 = vmatpush1.msra.mxu0 0.0
  %229 = vmatprep.subr.mxu0 0.0
  %230 = vmatpush1.msra.mxu0 0.0
  %231 = vmatprep.mubr.f32.mxu0 0.0
  %232 = vmatmul.mubr.f32.gmra.mrb[0].mxu0 %v90
  %v233 = vpop.f32.mrb[0].mxu0
  %v234 = vadd.f32 0.0, %v233
  %v235 = vpop.f32.mrb[0].mxu0
  %v236 = vadd.f32 0.0, %v235
  %237 = vdwg.mxu0
  %v238 = vadd.f32 %v92, %v163
  %v239 = vadd.f32 %v93, %v165
  %v240 = vadd.f32 %v94, %v234
  %v241 = vadd.f32 %v95, %v236
  %v242 = vxor.u32 %v238, 2147483648
  %v243 = vmul.f32 %v242, 1.442695
  %v244 = vpow.pop %v243
  %v245 = vadd.f32 %v244, 1.0
  %v246 = vrcp.pop %v245
  %v247 = vmul.f32 1.0, %v246
  %v248 = vxor.u32 %v239, 2147483648
  %v249 = vmul.f32 %v248, 1.442695
  %v250 = vpow.pop %v249
  %v251 = vadd.f32 %v250, 1.0
  %v252 = vrcp.pop %v251
  %v253 = vmul.f32 1.0, %v252
  %v254 = vtanh.pop %v240
  %v255 = vxor.u32 %v241, 2147483648
  %v256 = vmul.f32 %v255, 1.442695
  %v257 = vpow.pop %v256
  %v258 = vadd.f32 %v257, 1.0
  %v259 = vrcp.pop %v258
  %v260 = vmul.f32 1.0, %v259
  %v261 = vmul.f32 %v253, %v91
  %v262 = vmul.f32 %v247, %v254
  %v263 = vadd.f32 %v261, %v262
  %v264 = vtanh.pop %v263
  %v265 = vmul.f32 %v260, %v264
  %s266 = scalar_lea.vmem %s0, 32
  %v267 = vld [vmem:[%s266] sm:$0xff]
  %v268 = vld [vmem:[%s266 + $0x8] sm:$0xff]
  %v269 = vld [vmem:[%s266 + $0x10] sm:$0xff]
  %v270 = vld [vmem:[%s266 + $0x18] sm:$0xff]
  %271 = vmatprep.subr.mxu0 %v27
  %272 = vmatpush1.msra.mxu0 %v26
  %273 = vmatprep.subr.mxu0 %v31
  %274 = vmatpush1.msra.mxu0 %v30
  %275 = vmatprep.subr.mxu0 %v35
  %276 = vmatpush1.msra.mxu0 %v34
  %277 = vmatprep.subr.mxu0 %v39
  %278 = vmatpush1.msra.mxu0 %v38
  %279 = vmatprep.subr.mxu0 %v43
  %280 = vmatpush1.msra.mxu0 %v42
  %281 = vmatprep.subr.mxu0 %v47
  %282 = vmatpush1.msra.mxu0 %v46
  %283 = vmatprep.subr.mxu0 %v51
  %284 = vmatpush1.msra.mxu0 %v50
  %285 = vmatprep.subr.mxu0 %v55
  %286 = vmatpush1.msra.mxu0 %v54
  %287 = vmatprep.subr.mxu0 %v59
  %288 = vmatpush1.msra.mxu0 %v58
  %289 = vmatprep.subr.mxu0 %v63
  %290 = vmatpush1.msra.mxu0 %v62
  %291 = vmatprep.subr.mxu0 %v67
  %292 = vmatpush1.msra.mxu0 %v66
  %293 = vmatprep.subr.mxu0 %v71
  %294 = vmatpush1.msra.mxu0 %v70
  %295 = vmatprep.subr.mxu0 %v75
  %296 = vmatpush1.msra.mxu0 %v74
  %297 = vmatprep.subr.mxu0 %v79
  %298 = vmatpush1.msra.mxu0 %v78
  %299 = vmatprep.subr.mxu0 %v83
  %300 = vmatpush1.msra.mxu0 %v82
  %301 = vmatprep.subr.mxu0 %v87
  %302 = vmatpush1.msra.mxu0 %v86
  %303 = vmatprep.subr.mxu0 0.0
  %304 = vmatpush1.msra.mxu0 0.0
  %305 = vmatprep.subr.mxu0 0.0
  %306 = vmatpush1.msra.mxu0 0.0
  %307 = vmatprep.subr.mxu0 0.0
  %308 = vmatpush1.msra.mxu0 0.0
  %309 = vmatprep.subr.mxu0 0.0
  %310 = vmatpush1.msra.mxu0 0.0
  %311 = vmatprep.subr.mxu0 0.0
  %312 = vmatpush1.msra.mxu0 0.0
  %313 = vmatprep.subr.mxu0 0.0
  %314 = vmatpush1.msra.mxu0 0.0
  %315 = vmatprep.subr.mxu0 0.0
  %316 = vmatpush1.msra.mxu0 0.0
  %317 = vmatprep.subr.mxu0 0.0
  %318 = vmatpush1.msra.mxu0 0.0
  %319 = vmatprep.subr.mxu0 0.0
  %320 = vmatpush1.msra.mxu0 0.0
  %321 = vmatprep.subr.mxu0 0.0
  %322 = vmatpush1.msra.mxu0 0.0
  %323 = vmatprep.subr.mxu0 0.0
  %324 = vmatpush1.msra.mxu0 0.0
  %325 = vmatprep.subr.mxu0 0.0
  %326 = vmatpush1.msra.mxu0 0.0
  %327 = vmatprep.subr.mxu0 0.0
  %328 = vmatpush1.msra.mxu0 0.0
  %329 = vmatprep.subr.mxu0 0.0
  %330 = vmatpush1.msra.mxu0 0.0
  %331 = vmatprep.subr.mxu0 0.0
  %332 = vmatpush1.msra.mxu0 0.0
  %333 = vmatprep.subr.mxu0 0.0
  %334 = vmatpush1.msra.mxu0 0.0
  %335 = vmatprep.mubr.f32.mxu0 0.0
  %336 = vmatmul.mubr.f32.gmra.mrb[0].mxu0 %v265
  %v337 = vpop.f32.mrb[0].mxu0
  %v338 = vadd.f32 0.0, %v337
  %v339 = vpop.f32.mrb[0].mxu0
  %v340 = vadd.f32 0.0, %v339
  %341 = vdwg.mxu0
  %342 = vmatprep.subr.mxu0 %v29
  %343 = vmatpush1.msra.mxu0 %v28
  %344 = vmatprep.subr.mxu0 %v33
  %345 = vmatpush1.msra.mxu0 %v32
  %346 = vmatprep.subr.mxu0 %v37
  %347 = vmatpush1.msra.mxu0 %v36
  %348 = vmatprep.subr.mxu0 %v41
  %349 = vmatpush1.msra.mxu0 %v40
  %350 = vmatprep.subr.mxu0 %v45
  %351 = vmatpush1.msra.mxu0 %v44
  %352 = vmatprep.subr.mxu0 %v49
  %353 = vmatpush1.msra.mxu0 %v48
  %354 = vmatprep.subr.mxu0 %v53
  %355 = vmatpush1.msra.mxu0 %v52
  %356 = vmatprep.subr.mxu0 %v57
  %357 = vmatpush1.msra.mxu0 %v56
  %358 = vmatprep.subr.mxu0 %v61
  %359 = vmatpush1.msra.mxu0 %v60
  %360 = vmatprep.subr.mxu0 %v65
  %361 = vmatpush1.msra.mxu0 %v64
  %362 = vmatprep.subr.mxu0 %v69
  %363 = vmatpush1.msra.mxu0 %v68
  %364 = vmatprep.subr.mxu0 %v73
  %365 = vmatpush1.msra.mxu0 %v72
  %366 = vmatprep.subr.mxu0 %v77
  %367 = vmatpush1.msra.mxu0 %v76
  %368 = vmatprep.subr.mxu0 %v81
  %369 = vmatpush1.msra.mxu0 %v80
  %370 = vmatprep.subr.mxu0 %v85
  %371 = vmatpush1.msra.mxu0 %v84
  %372 = vmatprep.subr.mxu0 %v89
  %373 = vmatpush1.msra.mxu0 %v88
  %374 = vmatprep.subr.mxu0 0.0
  %375 = vmatpush1.msra.mxu0 0.0
  %376 = vmatprep.subr.mxu0 0.0
  %377 = vmatpush1.msra.mxu0 0.0
  %378 = vmatprep.subr.mxu0 0.0
  %379 = vmatpush1.msra.mxu0 0.0
  %380 = vmatprep.subr.mxu0 0.0
  %381 = vmatpush1.msra.mxu0 0.0
  %382 = vmatprep.subr.mxu0 0.0
  %383 = vmatpush1.msra.mxu0 0.0
  %384 = vmatprep.subr.mxu0 0.0
  %385 = vmatpush1.msra.mxu0 0.0
  %386 = vmatprep.subr.mxu0 0.0
  %387 = vmatpush1.msra.mxu0 0.0
  %388 = vmatprep.subr.mxu0 0.0
  %389 = vmatpush1.msra.mxu0 0.0
  %390 = vmatprep.subr.mxu0 0.0
  %391 = vmatpush1.msra.mxu0 0.0
  %392 = vmatprep.subr.mxu0 0.0
  %393 = vmatpush1.msra.mxu0 0.0
  %394 = vmatprep.subr.mxu0 0.0
  %395 = vmatpush1.msra.mxu0 0.0
  %396 = vmatprep.subr.mxu0 0.0
  %397 = vmatpush1.msra.mxu0 0.0
  %398 = vmatprep.subr.mxu0 0.0
  %399 = vmatpush1.msra.mxu0 0.0
  %400 = vmatprep.subr.mxu0 0.0
  %401 = vmatpush1.msra.mxu0 0.0
  %402 = vmatprep.subr.mxu0 0.0
  %403 = vmatpush1.msra.mxu0 0.0
  %404 = vmatprep.subr.mxu0 0.0
  %405 = vmatpush1.msra.mxu0 0.0
  %406 = vmatprep.mubr.f32.mxu0 0.0
  %407 = vmatmul.mubr.f32.gmra.mrb[0].mxu0 %v265
  %v408 = vpop.f32.mrb[0].mxu0
  %v409 = vadd.f32 0.0, %v408
  %v410 = vpop.f32.mrb[0].mxu0
  %v411 = vadd.f32 0.0, %v410
  %412 = vdwg.mxu0
  %v413 = vadd.f32 %v267, %v338
  %v414 = vadd.f32 %v268, %v340
  %v415 = vadd.f32 %v269, %v409
  %v416 = vadd.f32 %v270, %v411
  %v417 = vxor.u32 %v413, 2147483648
  %v418 = vmul.f32 %v417, 1.442695
  %v419 = vpow.pop %v418
  %v420 = vadd.f32 %v419, 1.0
  %v421 = vrcp.pop %v420
  %v422 = vmul.f32 1.0, %v421
  %v423 = vxor.u32 %v414, 2147483648
  %v424 = vmul.f32 %v423, 1.442695
  %v425 = vpow.pop %v424
  %v426 = vadd.f32 %v425, 1.0
  %v427 = vrcp.pop %v426
  %v428 = vmul.f32 1.0, %v427
  %v429 = vtanh.pop %v415
  %v430 = vxor.u32 %v416, 2147483648
  %v431 = vmul.f32 %v430, 1.442695
  %v432 = vpow.pop %v431
  %v433 = vadd.f32 %v432, 1.0
  %v434 = vrcp.pop %v433
  %v435 = vmul.f32 1.0, %v434
  %v436 = vmul.f32 %v428, %v263
  %v437 = vmul.f32 %v422, %v429
  %v438 = vadd.f32 %v436, %v437
  %v439 = vtanh.pop %v438
  %v440 = vmul.f32 %v435, %v439
  %s441 = scalar_lea.vmem %s0, 64
  %v442 = vld [vmem:[%s441] sm:$0xff]
  %v443 = vld [vmem:[%s441 + $0x8] sm:$0xff]
  %v444 = vld [vmem:[%s441 + $0x10] sm:$0xff]
  %v445 = vld [vmem:[%s441 + $0x18] sm:$0xff]
  %446 = vmatprep.subr.mxu0 %v27
  %447 = vmatpush1.msra.mxu0 %v26
  %448 = vmatprep.subr.mxu0 %v31
  %449 = vmatpush1.msra.mxu0 %v30
  %450 = vmatprep.subr.mxu0 %v35
  %451 = vmatpush1.msra.mxu0 %v34
  %452 = vmatprep.subr.mxu0 %v39
  %453 = vmatpush1.msra.mxu0 %v38
  %454 = vmatprep.subr.mxu0 %v43
  %455 = vmatpush1.msra.mxu0 %v42
  %456 = vmatprep.subr.mxu0 %v47
  %457 = vmatpush1.msra.mxu0 %v46
  %458 = vmatprep.subr.mxu0 %v51
  %459 = vmatpush1.msra.mxu0 %v50
  %460 = vmatprep.subr.mxu0 %v55
  %461 = vmatpush1.msra.mxu0 %v54
  %462 = vmatprep.subr.mxu0 %v59
  %463 = vmatpush1.msra.mxu0 %v58
  %464 = vmatprep.subr.mxu0 %v63
  %465 = vmatpush1.msra.mxu0 %v62
  %466 = vmatprep.subr.mxu0 %v67
  %467 = vmatpush1.msra.mxu0 %v66
  %468 = vmatprep.subr.mxu0 %v71
  %469 = vmatpush1.msra.mxu0 %v70
  %470 = vmatprep.subr.mxu0 %v75
  %471 = vmatpush1.msra.mxu0 %v74
  %472 = vmatprep.subr.mxu0 %v79
  %473 = vmatpush1.msra.mxu0 %v78
  %474 = vmatprep.subr.mxu0 %v83
  %475 = vmatpush1.msra.mxu0 %v82
  %476 = vmatprep.subr.mxu0 %v87
  %477 = vmatpush1.msra.mxu0 %v86
  %478 = vmatprep.subr.mxu0 0.0
  %479 = vmatpush1.msra.mxu0 0.0
  %480 = vmatprep.subr.mxu0 0.0
  %481 = vmatpush1.msra.mxu0 0.0
  %482 = vmatprep.subr.mxu0 0.0
  %483 = vmatpush1.msra.mxu0 0.0
  %484 = vmatprep.subr.mxu0 0.0
  %485 = vmatpush1.msra.mxu0 0.0
  %486 = vmatprep.subr.mxu0 0.0
  %487 = vmatpush1.msra.mxu0 0.0
  %488 = vmatprep.subr.mxu0 0.0
  %489 = vmatpush1.msra.mxu0 0.0
  %490 = vmatprep.subr.mxu0 0.0
  %491 = vmatpush1.msra.mxu0 0.0
  %492 = vmatprep.subr.mxu0 0.0
  %493 = vmatpush1.msra.mxu0 0.0
  %494 = vmatprep.subr.mxu0 0.0
  %495 = vmatpush1.msra.mxu0 0.0
  %496 = vmatprep.subr.mxu0 0.0
  %497 = vmatpush1.msra.mxu0 0.0
  %498 = vmatprep.subr.mxu0 0.0
  %499 = vmatpush1.msra.mxu0 0.0
  %500 = vmatprep.subr.mxu0 0.0
  %501 = vmatpush1.msra.mxu0 0.0
  %502 = vmatprep.subr.mxu0 0.0
  %503 = vmatpush1.msra.mxu0 0.0
  %504 = vmatprep.subr.mxu0 0.0
  %505 = vmatpush1.msra.mxu0 0.0
  %506 = vmatprep.subr.mxu0 0.0
  %507 = vmatpush1.msra.mxu0 0.0
  %508 = vmatprep.subr.mxu0 0.0
  %509 = vmatpush1.msra.mxu0 0.0
  %510 = vmatprep.mubr.f32.mxu0 0.0
  %511 = vmatmul.mubr.f32.gmra.mrb[0].mxu0 %v440
  %v512 = vpop.f32.mrb[0].mxu0
  %v513 = vadd.f32 0.0, %v512
  %v514 = vpop.f32.mrb[0].mxu0
  %v515 = vadd.f32 0.0, %v514
  %516 = vdwg.mxu0
  %517 = vmatprep.subr.mxu0 %v29
  %518 = vmatpush1.msra.mxu0 %v28
  %519 = vmatprep.subr.mxu0 %v33
  %520 = vmatpush1.msra.mxu0 %v32
  %521 = vmatprep.subr.mxu0 %v37
  %522 = vmatpush1.msra.mxu0 %v36
  %523 = vmatprep.subr.mxu0 %v41
  %524 = vmatpush1.msra.mxu0 %v40
  %525 = vmatprep.subr.mxu0 %v45
  %526 = vmatpush1.msra.mxu0 %v44
  %527 = vmatprep.subr.mxu0 %v49
  %528 = vmatpush1.msra.mxu0 %v48
  %529 = vmatprep.subr.mxu0 %v53
  %530 = vmatpush1.msra.mxu0 %v52
  %531 = vmatprep.subr.mxu0 %v57
  %532 = vmatpush1.msra.mxu0 %v56
  %533 = vmatprep.subr.mxu0 %v61
  %534 = vmatpush1.msra.mxu0 %v60
  %535 = vmatprep.subr.mxu0 %v65
  %536 = vmatpush1.msra.mxu0 %v64
  %537 = vmatprep.subr.mxu0 %v69
  %538 = vmatpush1.msra.mxu0 %v68
  %539 = vmatprep.subr.mxu0 %v73
  %540 = vmatpush1.msra.mxu0 %v72
  %541 = vmatprep.subr.mxu0 %v77
  %542 = vmatpush1.msra.mxu0 %v76
  %543 = vmatprep.subr.mxu0 %v81
  %544 = vmatpush1.msra.mxu0 %v80
  %545 = vmatprep.subr.mxu0 %v85
  %546 = vmatpush1.msra.mxu0 %v84
  %547 = vmatprep.subr.mxu0 %v89
  %548 = vmatpush1.msra.mxu0 %v88
  %549 = vmatprep.subr.mxu0 0.0
  %550 = vmatpush1.msra.mxu0 0.0
  %551 = vmatprep.subr.mxu0 0.0
  %552 = vmatpush1.msra.mxu0 0.0
  %553 = vmatprep.subr.mxu0 0.0
  %554 = vmatpush1.msra.mxu0 0.0
  %555 = vmatprep.subr.mxu0 0.0
  %556 = vmatpush1.msra.mxu0 0.0
  %557 = vmatprep.subr.mxu0 0.0
  %558 = vmatpush1.msra.mxu0 0.0
  %559 = vmatprep.subr.mxu0 0.0
  %560 = vmatpush1.msra.mxu0 0.0
  %561 = vmatprep.subr.mxu0 0.0
  %562 = vmatpush1.msra.mxu0 0.0
  %563 = vmatprep.subr.mxu0 0.0
  %564 = vmatpush1.msra.mxu0 0.0
  %565 = vmatprep.subr.mxu0 0.0
  %566 = vmatpush1.msra.mxu0 0.0
  %567 = vmatprep.subr.mxu0 0.0
  %568 = vmatpush1.msra.mxu0 0.0
  %569 = vmatprep.subr.mxu0 0.0
  %570 = vmatpush1.msra.mxu0 0.0
  %571 = vmatprep.subr.mxu0 0.0
  %572 = vmatpush1.msra.mxu0 0.0
  %573 = vmatprep.subr.mxu0 0.0
  %574 = vmatpush1.msra.mxu0 0.0
  %575 = vmatprep.subr.mxu0 0.0
  %576 = vmatpush1.msra.mxu0 0.0
  %577 = vmatprep.subr.mxu0 0.0
  %578 = vmatpush1.msra.mxu0 0.0
  %579 = vmatprep.subr.mxu0 0.0
  %580 = vmatpush1.msra.mxu0 0.0
  %581 = vmatprep.mubr.f32.mxu0 0.0
  %582 = vmatmul.mubr.f32.gmra.mrb[0].mxu0 %v440
  %v583 = vpop.f32.mrb[0].mxu0
  %v584 = vadd.f32 0.0, %v583
  %v585 = vpop.f32.mrb[0].mxu0
  %v586 = vadd.f32 0.0, %v585
  %587 = vdwg.mxu0
  %v588 = vadd.f32 %v442, %v513
  %v589 = vadd.f32 %v443, %v515
  %v590 = vadd.f32 %v444, %v584
  %v591 = vadd.f32 %v445, %v586
  %v592 = vxor.u32 %v588, 2147483648
  %v593 = vmul.f32 %v592, 1.442695
  %v594 = vpow.pop %v593
  %v595 = vadd.f32 %v594, 1.0
  %v596 = vrcp.pop %v595
  %v597 = vmul.f32 1.0, %v596
  %v598 = vxor.u32 %v589, 2147483648
  %v599 = vmul.f32 %v598, 1.442695
  %v600 = vpow.pop %v599
  %v601 = vadd.f32 %v600, 1.0
  %v602 = vrcp.pop %v601
  %v603 = vmul.f32 1.0, %v602
  %v604 = vtanh.pop %v590
  %v605 = vxor.u32 %v591, 2147483648
  %v606 = vmul.f32 %v605, 1.442695
  %v607 = vpow.pop %v606
  %v608 = vadd.f32 %v607, 1.0
  %v609 = vrcp.pop %v608
  %v610 = vmul.f32 1.0, %v609
  %v611 = vmul.f32 %v603, %v438
  %v612 = vmul.f32 %v597, %v604
  %v613 = vadd.f32 %v611, %v612
  %v614 = vtanh.pop %v613
  %v615 = vmul.f32 %v610, %v614
  %s616 = scalar_lea.vmem %s0, 96
  %v617 = vld [vmem:[%s616] sm:$0xff]
  %v618 = vld [vmem:[%s616 + $0x8] sm:$0xff]
  %v619 = vld [vmem:[%s616 + $0x10] sm:$0xff]
  %v620 = vld [vmem:[%s616 + $0x18] sm:$0xff]
  %621 = vmatprep.subr.mxu0 %v27
  %622 = vmatpush1.msra.mxu0 %v26
  %623 = vmatprep.subr.mxu0 %v31
  %624 = vmatpush1.msra.mxu0 %v30
  %625 = vmatprep.subr.mxu0 %v35
  %626 = vmatpush1.msra.mxu0 %v34
  %627 = vmatprep.subr.mxu0 %v39
  %628 = vmatpush1.msra.mxu0 %v38
  %629 = vmatprep.subr.mxu0 %v43
  %630 = vmatpush1.msra.mxu0 %v42
  %631 = vmatprep.subr.mxu0 %v47
  %632 = vmatpush1.msra.mxu0 %v46
  %633 = vmatprep.subr.mxu0 %v51
  %634 = vmatpush1.msra.mxu0 %v50
  %635 = vmatprep.subr.mxu0 %v55
  %636 = vmatpush1.msra.mxu0 %v54
  %637 = vmatprep.subr.mxu0 %v59
  %638 = vmatpush1.msra.mxu0 %v58
  %639 = vmatprep.subr.mxu0 %v63
  %640 = vmatpush1.msra.mxu0 %v62
  %641 = vmatprep.subr.mxu0 %v67
  %642 = vmatpush1.msra.mxu0 %v66
  %643 = vmatprep.subr.mxu0 %v71
  %644 = vmatpush1.msra.mxu0 %v70
  %645 = vmatprep.subr.mxu0 %v75
  %646 = vmatpush1.msra.mxu0 %v74
  %647 = vmatprep.subr.mxu0 %v79
  %648 = vmatpush1.msra.mxu0 %v78
  %649 = vmatprep.subr.mxu0 %v83
  %650 = vmatpush1.msra.mxu0 %v82
  %651 = vmatprep.subr.mxu0 %v87
  %652 = vmatpush1.msra.mxu0 %v86
  %653 = vmatprep.subr.mxu0 0.0
  %654 = vmatpush1.msra.mxu0 0.0
  %655 = vmatprep.subr.mxu0 0.0
  %656 = vmatpush1.msra.mxu0 0.0
  %657 = vmatprep.subr.mxu0 0.0
  %658 = vmatpush1.msra.mxu0 0.0
  %659 = vmatprep.subr.mxu0 0.0
  %660 = vmatpush1.msra.mxu0 0.0
  %661 = vmatprep.subr.mxu0 0.0
  %662 = vmatpush1.msra.mxu0 0.0
  %663 = vmatprep.subr.mxu0 0.0
  %664 = vmatpush1.msra.mxu0 0.0
  %665 = vmatprep.subr.mxu0 0.0
  %666 = vmatpush1.msra.mxu0 0.0
  %667 = vmatprep.subr.mxu0 0.0
  %668 = vmatpush1.msra.mxu0 0.0
  %669 = vmatprep.subr.mxu0 0.0
  %670 = vmatpush1.msra.mxu0 0.0
  %671 = vmatprep.subr.mxu0 0.0
  %672 = vmatpush1.msra.mxu0 0.0
  %673 = vmatprep.subr.mxu0 0.0
  %674 = vmatpush1.msra.mxu0 0.0
  %675 = vmatprep.subr.mxu0 0.0
  %676 = vmatpush1.msra.mxu0 0.0
  %677 = vmatprep.subr.mxu0 0.0
  %678 = vmatpush1.msra.mxu0 0.0
  %679 = vmatprep.subr.mxu0 0.0
  %680 = vmatpush1.msra.mxu0 0.0
  %681 = vmatprep.subr.mxu0 0.0
  %682 = vmatpush1.msra.mxu0 0.0
  %683 = vmatprep.subr.mxu0 0.0
  %684 = vmatpush1.msra.mxu0 0.0
  %685 = vmatprep.mubr.f32.mxu0 0.0
  %686 = vmatmul.mubr.f32.gmra.mrb[0].mxu0 %v615
  %v687 = vpop.f32.mrb[0].mxu0
  %v688 = vadd.f32 0.0, %v687
  %v689 = vpop.f32.mrb[0].mxu0
  %v690 = vadd.f32 0.0, %v689
  %691 = vdwg.mxu0
  %692 = vmatprep.subr.mxu0 %v29
  %693 = vmatpush1.msra.mxu0 %v28
  %694 = vmatprep.subr.mxu0 %v33
  %695 = vmatpush1.msra.mxu0 %v32
  %696 = vmatprep.subr.mxu0 %v37
  %697 = vmatpush1.msra.mxu0 %v36
  %698 = vmatprep.subr.mxu0 %v41
  %699 = vmatpush1.msra.mxu0 %v40
  %700 = vmatprep.subr.mxu0 %v45
  %701 = vmatpush1.msra.mxu0 %v44
  %702 = vmatprep.subr.mxu0 %v49
  %703 = vmatpush1.msra.mxu0 %v48
  %704 = vmatprep.subr.mxu0 %v53
  %705 = vmatpush1.msra.mxu0 %v52
  %706 = vmatprep.subr.mxu0 %v57
  %707 = vmatpush1.msra.mxu0 %v56
  %708 = vmatprep.subr.mxu0 %v61
  %709 = vmatpush1.msra.mxu0 %v60
  %710 = vmatprep.subr.mxu0 %v65
  %711 = vmatpush1.msra.mxu0 %v64
  %712 = vmatprep.subr.mxu0 %v69
  %713 = vmatpush1.msra.mxu0 %v68
  %714 = vmatprep.subr.mxu0 %v73
  %715 = vmatpush1.msra.mxu0 %v72
  %716 = vmatprep.subr.mxu0 %v77
  %717 = vmatpush1.msra.mxu0 %v76
  %718 = vmatprep.subr.mxu0 %v81
  %719 = vmatpush1.msra.mxu0 %v80
  %720 = vmatprep.subr.mxu0 %v85
  %721 = vmatpush1.msra.mxu0 %v84
  %722 = vmatprep.subr.mxu0 %v89
  %723 = vmatpush1.msra.mxu0 %v88
  %724 = vmatprep.subr.mxu0 0.0
  %725 = vmatpush1.msra.mxu0 0.0
  %726 = vmatprep.subr.mxu0 0.0
  %727 = vmatpush1.msra.mxu0 0.0
  %728 = vmatprep.subr.mxu0 0.0
  %729 = vmatpush1.msra.mxu0 0.0
  %730 = vmatprep.subr.mxu0 0.0
  %731 = vmatpush1.msra.mxu0 0.0
  %732 = vmatprep.subr.mxu0 0.0
  %733 = vmatpush1.msra.mxu0 0.0
  %734 = vmatprep.subr.mxu0 0.0
  %735 = vmatpush1.msra.mxu0 0.0
  %736 = vmatprep.subr.mxu0 0.0
  %737 = vmatpush1.msra.mxu0 0.0
  %738 = vmatprep.subr.mxu0 0.0
  %739 = vmatpush1.msra.mxu0 0.0
  %740 = vmatprep.subr.mxu0 0.0
  %741 = vmatpush1.msra.mxu0 0.0
  %742 = vmatprep.subr.mxu0 0.0
  %743 = vmatpush1.msra.mxu0 0.0
  %744 = vmatprep.subr.mxu0 0.0
  %745 = vmatpush1.msra.mxu0 0.0
  %746 = vmatprep.subr.mxu0 0.0
  %747 = vmatpush1.msra.mxu0 0.0
  %748 = vmatprep.subr.mxu0 0.0
  %749 = vmatpush1.msra.mxu0 0.0
  %750 = vmatprep.subr.mxu0 0.0
  %751 = vmatpush1.msra.mxu0 0.0
  %752 = vmatprep.subr.mxu0 0.0
  %753 = vmatpush1.msra.mxu0 0.0
  %754 = vmatprep.subr.mxu0 0.0
  %755 = vmatpush1.msra.mxu0 0.0
  %756 = vmatprep.mubr.f32.mxu0 0.0
  %757 = vmatmul.mubr.f32.gmra.mrb[0].mxu0 %v615
  %v758 = vpop.f32.mrb[0].mxu0
  %v759 = vadd.f32 0.0, %v758
  %v760 = vpop.f32.mrb[0].mxu0
  %v761 = vadd.f32 0.0, %v760
  %762 = vdwg.mxu0
  %v763 = vadd.f32 %v617, %v688
  %v764 = vadd.f32 %v618, %v690
  %v765 = vadd.f32 %v619, %v759
  %v766 = vadd.f32 %v620, %v761
  %v767 = vxor.u32 %v763, 2147483648
  %v768 = vmul.f32 %v767, 1.442695
  %v769 = vpow.pop %v768
  %v770 = vadd.f32 %v769, 1.0
  %v771 = vrcp.pop %v770
  %v772 = vmul.f32 1.0, %v771
  %v773 = vxor.u32 %v764, 2147483648
  %v774 = vmul.f32 %v773, 1.442695
  %v775 = vpow.pop %v774
  %v776 = vadd.f32 %v775, 1.0
  %v777 = vrcp.pop %v776
  %v778 = vmul.f32 1.0, %v777
  %v779 = vtanh.pop %v765
  %v780 = vxor.u32 %v766, 2147483648
  %v781 = vmul.f32 %v780, 1.442695
  %v782 = vpow.pop %v781
  %v783 = vadd.f32 %v782, 1.0
  %v784 = vrcp.pop %v783
  %v785 = vmul.f32 1.0, %v784
  %v786 = vmul.f32 %v778, %v613
  %v787 = vmul.f32 %v772, %v779
  %v788 = vadd.f32 %v786, %v787
  %v789 = vtanh.pop %v788
  %v790 = vmul.f32 %v785, %v789
  %s791 = scalar_lea.vmem %s0, 128
  %v792 = vld [vmem:[%s791] sm:$0xff]
  %v793 = vld [vmem:[%s791 + $0x8] sm:$0xff]
  %v794 = vld [vmem:[%s791 + $0x10] sm:$0xff]
  %v795 = vld [vmem:[%s791 + $0x18] sm:$0xff]
  %796 = vmatprep.subr.mxu0 %v27
  %797 = vmatpush1.msra.mxu0 %v26
  %798 = vmatprep.subr.mxu0 %v31
  %799 = vmatpush1.msra.mxu0 %v30
  %800 = vmatprep.subr.mxu0 %v35
  %801 = vmatpush1.msra.mxu0 %v34
  %802 = vmatprep.subr.mxu0 %v39
  %803 = vmatpush1.msra.mxu0 %v38
  %804 = vmatprep.subr.mxu0 %v43
  %805 = vmatpush1.msra.mxu0 %v42
  %806 = vmatprep.subr.mxu0 %v47
  %807 = vmatpush1.msra.mxu0 %v46
  %808 = vmatprep.subr.mxu0 %v51
  %809 = vmatpush1.msra.mxu0 %v50
  %810 = vmatprep.subr.mxu0 %v55
  %811 = vmatpush1.msra.mxu0 %v54
  %812 = vmatprep.subr.mxu0 %v59
  %813 = vmatpush1.msra.mxu0 %v58
  %814 = vmatprep.subr.mxu0 %v63
  %815 = vmatpush1.msra.mxu0 %v62
  %816 = vmatprep.subr.mxu0 %v67
  %817 = vmatpush1.msra.mxu0 %v66
  %818 = vmatprep.subr.mxu0 %v71
  %819 = vmatpush1.msra.mxu0 %v70
  %820 = vmatprep.subr.mxu0 %v75
  %821 = vmatpush1.msra.mxu0 %v74
  %822 = vmatprep.subr.mxu0 %v79
  %823 = vmatpush1.msra.mxu0 %v78
  %824 = vmatprep.subr.mxu0 %v83
  %825 = vmatpush1.msra.mxu0 %v82
  %826 = vmatprep.subr.mxu0 %v87
  %827 = vmatpush1.msra.mxu0 %v86
  %828 = vmatprep.subr.mxu0 0.0
  %829 = vmatpush1.msra.mxu0 0.0
  %830 = vmatprep.subr.mxu0 0.0
  %831 = vmatpush1.msra.mxu0 0.0
  %832 = vmatprep.subr.mxu0 0.0
  %833 = vmatpush1.msra.mxu0 0.0
  %834 = vmatprep.subr.mxu0 0.0
  %835 = vmatpush1.msra.mxu0 0.0
  %836 = vmatprep.subr.mxu0 0.0
  %837 = vmatpush1.msra.mxu0 0.0
  %838 = vmatprep.subr.mxu0 0.0
  %839 = vmatpush1.msra.mxu0 0.0
  %840 = vmatprep.subr.mxu0 0.0
  %841 = vmatpush1.msra.mxu0 0.0
  %842 = vmatprep.subr.mxu0 0.0
  %843 = vmatpush1.msra.mxu0 0.0
  %844 = vmatprep.subr.mxu0 0.0
  %845 = vmatpush1.msra.mxu0 0.0
  %846 = vmatprep.subr.mxu0 0.0
  %847 = vmatpush1.msra.mxu0 0.0
  %848 = vmatprep.subr.mxu0 0.0
  %849 = vmatpush1.msra.mxu0 0.0
  %850 = vmatprep.subr.mxu0 0.0
  %851 = vmatpush1.msra.mxu0 0.0
  %852 = vmatprep.subr.mxu0 0.0
  %853 = vmatpush1.msra.mxu0 0.0
  %854 = vmatprep.subr.mxu0 0.0
  %855 = vmatpush1.msra.mxu0 0.0
  %856 = vmatprep.subr.mxu0 0.0
  %857 = vmatpush1.msra.mxu0 0.0
  %858 = vmatprep.subr.mxu0 0.0
  %859 = vmatpush1.msra.mxu0 0.0
  %860 = vmatprep.mubr.f32.mxu0 0.0
  %861 = vmatmul.mubr.f32.gmra.mrb[0].mxu0 %v790
  %v862 = vpop.f32.mrb[0].mxu0
  %v863 = vadd.f32 0.0, %v862
  %v864 = vpop.f32.mrb[0].mxu0
  %v865 = vadd.f32 0.0, %v864
  %866 = vdwg.mxu0
  %867 = vmatprep.subr.mxu0 %v29
  %868 = vmatpush1.msra.mxu0 %v28
  %869 = vmatprep.subr.mxu0 %v33
  %870 = vmatpush1.msra.mxu0 %v32
  %871 = vmatprep.subr.mxu0 %v37
  %872 = vmatpush1.msra.mxu0 %v36
  %873 = vmatprep.subr.mxu0 %v41
  %874 = vmatpush1.msra.mxu0 %v40
  %875 = vmatprep.subr.mxu0 %v45
  %876 = vmatpush1.msra.mxu0 %v44
  %877 = vmatprep.subr.mxu0 %v49
  %878 = vmatpush1.msra.mxu0 %v48
  %879 = vmatprep.subr.mxu0 %v53
  %880 = vmatpush1.msra.mxu0 %v52
  %881 = vmatprep.subr.mxu0 %v57
  %882 = vmatpush1.msra.mxu0 %v56
  %883 = vmatprep.subr.mxu0 %v61
  %884 = vmatpush1.msra.mxu0 %v60
  %885 = vmatprep.subr.mxu0 %v65
  %886 = vmatpush1.msra.mxu0 %v64
  %887 = vmatprep.subr.mxu0 %v69
  %888 = vmatpush1.msra.mxu0 %v68
  %889 = vmatprep.subr.mxu0 %v73
  %890 = vmatpush1.msra.mxu0 %v72
  %891 = vmatprep.subr.mxu0 %v77
  %892 = vmatpush1.msra.mxu0 %v76
  %893 = vmatprep.subr.mxu0 %v81
  %894 = vmatpush1.msra.mxu0 %v80
  %895 = vmatprep.subr.mxu0 %v85
  %896 = vmatpush1.msra.mxu0 %v84
  %897 = vmatprep.subr.mxu0 %v89
  %898 = vmatpush1.msra.mxu0 %v88
  %899 = vmatprep.subr.mxu0 0.0
  %900 = vmatpush1.msra.mxu0 0.0
  %901 = vmatprep.subr.mxu0 0.0
  %902 = vmatpush1.msra.mxu0 0.0
  %903 = vmatprep.subr.mxu0 0.0
  %904 = vmatpush1.msra.mxu0 0.0
  %905 = vmatprep.subr.mxu0 0.0
  %906 = vmatpush1.msra.mxu0 0.0
  %907 = vmatprep.subr.mxu0 0.0
  %908 = vmatpush1.msra.mxu0 0.0
  %909 = vmatprep.subr.mxu0 0.0
  %910 = vmatpush1.msra.mxu0 0.0
  %911 = vmatprep.subr.mxu0 0.0
  %912 = vmatpush1.msra.mxu0 0.0
  %913 = vmatprep.subr.mxu0 0.0
  %914 = vmatpush1.msra.mxu0 0.0
  %915 = vmatprep.subr.mxu0 0.0
  %916 = vmatpush1.msra.mxu0 0.0
  %917 = vmatprep.subr.mxu0 0.0
  %918 = vmatpush1.msra.mxu0 0.0
  %919 = vmatprep.subr.mxu0 0.0
  %920 = vmatpush1.msra.mxu0 0.0
  %921 = vmatprep.subr.mxu0 0.0
  %922 = vmatpush1.msra.mxu0 0.0
  %923 = vmatprep.subr.mxu0 0.0
  %924 = vmatpush1.msra.mxu0 0.0
  %925 = vmatprep.subr.mxu0 0.0
  %926 = vmatpush1.msra.mxu0 0.0
  %927 = vmatprep.subr.mxu0 0.0
  %928 = vmatpush1.msra.mxu0 0.0
  %929 = vmatprep.subr.mxu0 0.0
  %930 = vmatpush1.msra.mxu0 0.0
  %931 = vmatprep.mubr.f32.mxu0 0.0
  %932 = vmatmul.mubr.f32.gmra.mrb[0].mxu0 %v790
  %v933 = vpop.f32.mrb[0].mxu0
  %v934 = vadd.f32 0.0, %v933
  %v935 = vpop.f32.mrb[0].mxu0
  %v936 = vadd.f32 0.0, %v935
  %937 = vdwg.mxu0
  %v938 = vadd.f32 %v792, %v863
  %v939 = vadd.f32 %v793, %v865
  %v940 = vadd.f32 %v794, %v934
  %v941 = vadd.f32 %v795, %v936
  %v942 = vxor.u32 %v938, 2147483648
  %v943 = vmul.f32 %v942, 1.442695
  %v944 = vpow.pop %v943
  %v945 = vadd.f32 %v944, 1.0
  %v946 = vrcp.pop %v945
  %v947 = vmul.f32 1.0, %v946
  %v948 = vxor.u32 %v939, 2147483648
  %v949 = vmul.f32 %v948, 1.442695
  %v950 = vpow.pop %v949
  %v951 = vadd.f32 %v950, 1.0
  %v952 = vrcp.pop %v951
  %v953 = vmul.f32 1.0, %v952
  %v954 = vtanh.pop %v940
  %v955 = vxor.u32 %v941, 2147483648
  %v956 = vmul.f32 %v955, 1.442695
  %v957 = vpow.pop %v956
  %v958 = vadd.f32 %v957, 1.0
  %v959 = vrcp.pop %v958
  %v960 = vmul.f32 1.0, %v959
  %v961 = vmul.f32 %v953, %v788
  %v962 = vmul.f32 %v947, %v954
  %v963 = vadd.f32 %v961, %v962
  %v964 = vtanh.pop %v963
  %v965 = vmul.f32 %v960, %v964
  %s966 = scalar_lea.vmem %s0, 160
  %v967 = vld [vmem:[%s966] sm:$0xff]
  %v968 = vld [vmem:[%s966 + $0x8] sm:$0xff]
  %v969 = vld [vmem:[%s966 + $0x10] sm:$0xff]
  %v970 = vld [vmem:[%s966 + $0x18] sm:$0xff]
  %971 = vmatprep.subr.mxu0 %v27
  %972 = vmatpush1.msra.mxu0 %v26
  %973 = vmatprep.subr.mxu0 %v31
  %974 = vmatpush1.msra.mxu0 %v30
  %975 = vmatprep.subr.mxu0 %v35
  %976 = vmatpush1.msra.mxu0 %v34
  %977 = vmatprep.subr.mxu0 %v39
  %978 = vmatpush1.msra.mxu0 %v38
  %979 = vmatprep.subr.mxu0 %v43
  %980 = vmatpush1.msra.mxu0 %v42
  %981 = vmatprep.subr.mxu0 %v47
  %982 = vmatpush1.msra.mxu0 %v46
  %983 = vmatprep.subr.mxu0 %v51
  %984 = vmatpush1.msra.mxu0 %v50
  %985 = vmatprep.subr.mxu0 %v55
  %986 = vmatpush1.msra.mxu0 %v54
  %987 = vmatprep.subr.mxu0 %v59
  %988 = vmatpush1.msra.mxu0 %v58
  %989 = vmatprep.subr.mxu0 %v63
  %990 = vmatpush1.msra.mxu0 %v62
  %991 = vmatprep.subr.mxu0 %v67
  %992 = vmatpush1.msra.mxu0 %v66
  %993 = vmatprep.subr.mxu0 %v71
  %994 = vmatpush1.msra.mxu0 %v70
  %995 = vmatprep.subr.mxu0 %v75
  %996 = vmatpush1.msra.mxu0 %v74
  %997 = vmatprep.subr.mxu0 %v79
  %998 = vmatpush1.msra.mxu0 %v78
  %999 = vmatprep.subr.mxu0 %v83
  %1000 = vmatpush1.msra.mxu0 %v82
  %1001 = vmatprep.subr.mxu0 %v87
  %1002 = vmatpush1.msra.mxu0 %v86
  %1003 = vmatprep.subr.mxu0 0.0
  %1004 = vmatpush1.msra.mxu0 0.0
  %1005 = vmatprep.subr.mxu0 0.0
  %1006 = vmatpush1.msra.mxu0 0.0
  %1007 = vmatprep.subr.mxu0 0.0
  %1008 = vmatpush1.msra.mxu0 0.0
  %1009 = vmatprep.subr.mxu0 0.0
  %1010 = vmatpush1.msra.mxu0 0.0
  %1011 = vmatprep.subr.mxu0 0.0
  %1012 = vmatpush1.msra.mxu0 0.0
  %1013 = vmatprep.subr.mxu0 0.0
  %1014 = vmatpush1.msra.mxu0 0.0
  %1015 = vmatprep.subr.mxu0 0.0
  %1016 = vmatpush1.msra.mxu0 0.0
  %1017 = vmatprep.subr.mxu0 0.0
  %1018 = vmatpush1.msra.mxu0 0.0
  %1019 = vmatprep.subr.mxu0 0.0
  %1020 = vmatpush1.msra.mxu0 0.0
  %1021 = vmatprep.subr.mxu0 0.0
  %1022 = vmatpush1.msra.mxu0 0.0
  %1023 = vmatprep.subr.mxu0 0.0
  %1024 = vmatpush1.msra.mxu0 0.0
  %1025 = vmatprep.subr.mxu0 0.0
  %1026 = vmatpush1.msra.mxu0 0.0
  %1027 = vmatprep.subr.mxu0 0.0
  %1028 = vmatpush1.msra.mxu0 0.0
  %1029 = vmatprep.subr.mxu0 0.0
  %1030 = vmatpush1.msra.mxu0 0.0
  %1031 = vmatprep.subr.mxu0 0.0
  %1032 = vmatpush1.msra.mxu0 0.0
  %1033 = vmatprep.subr.mxu0 0.0
  %1034 = vmatpush1.msra.mxu0 0.0
  %1035 = vmatprep.mubr.f32.mxu0 0.0
  %1036 = vmatmul.mubr.f32.gmra.mrb[0].mxu0 %v965
  %v1037 = vpop.f32.mrb[0].mxu0
  %v1038 = vadd.f32 0.0, %v1037
  %v1039 = vpop.f32.mrb[0].mxu0
  %v1040 = vadd.f32 0.0, %v1039
  %1041 = vdwg.mxu0
  %1042 = vmatprep.subr.mxu0 %v29
  %1043 = vmatpush1.msra.mxu0 %v28
  %1044 = vmatprep.subr.mxu0 %v33
  %1045 = vmatpush1.msra.mxu0 %v32
  %1046 = vmatprep.subr.mxu0 %v37
  %1047 = vmatpush1.msra.mxu0 %v36
  %1048 = vmatprep.subr.mxu0 %v41
  %1049 = vmatpush1.msra.mxu0 %v40
  %1050 = vmatprep.subr.mxu0 %v45
  %1051 = vmatpush1.msra.mxu0 %v44
  %1052 = vmatprep.subr.mxu0 %v49
  %1053 = vmatpush1.msra.mxu0 %v48
  %1054 = vmatprep.subr.mxu0 %v53
  %1055 = vmatpush1.msra.mxu0 %v52
  %1056 = vmatprep.subr.mxu0 %v57
  %1057 = vmatpush1.msra.mxu0 %v56
  %1058 = vmatprep.subr.mxu0 %v61
  %1059 = vmatpush1.msra.mxu0 %v60
  %1060 = vmatprep.subr.mxu0 %v65
  %1061 = vmatpush1.msra.mxu0 %v64
  %1062 = vmatprep.subr.mxu0 %v69
  %1063 = vmatpush1.msra.mxu0 %v68
  %1064 = vmatprep.subr.mxu0 %v73
  %1065 = vmatpush1.msra.mxu0 %v72
  %1066 = vmatprep.subr.mxu0 %v77
  %1067 = vmatpush1.msra.mxu0 %v76
  %1068 = vmatprep.subr.mxu0 %v81
  %1069 = vmatpush1.msra.mxu0 %v80
  %1070 = vmatprep.subr.mxu0 %v85
  %1071 = vmatpush1.msra.mxu0 %v84
  %1072 = vmatprep.subr.mxu0 %v89
  %1073 = vmatpush1.msra.mxu0 %v88
  %1074 = vmatprep.subr.mxu0 0.0
  %1075 = vmatpush1.msra.mxu0 0.0
  %1076 = vmatprep.subr.mxu0 0.0
  %1077 = vmatpush1.msra.mxu0 0.0
  %1078 = vmatprep.subr.mxu0 0.0
  %1079 = vmatpush1.msra.mxu0 0.0
  %1080 = vmatprep.subr.mxu0 0.0
  %1081 = vmatpush1.msra.mxu0 0.0
  %1082 = vmatprep.subr.mxu0 0.0
  %1083 = vmatpush1.msra.mxu0 0.0
  %1084 = vmatprep.subr.mxu0 0.0
  %1085 = vmatpush1.msra.mxu0 0.0
  %1086 = vmatprep.subr.mxu0 0.0
  %1087 = vmatpush1.msra.mxu0 0.0
  %1088 = vmatprep.subr.mxu0 0.0
  %1089 = vmatpush1.msra.mxu0 0.0
  %1090 = vmatprep.subr.mxu0 0.0
  %1091 = vmatpush1.msra.mxu0 0.0
  %1092 = vmatprep.subr.mxu0 0.0
  %1093 = vmatpush1.msra.mxu0 0.0
  %1094 = vmatprep.subr.mxu0 0.0
  %1095 = vmatpush1.msra.mxu0 0.0
  %1096 = vmatprep.subr.mxu0 0.0
  %1097 = vmatpush1.msra.mxu0 0.0
  %1098 = vmatprep.subr.mxu0 0.0
  %1099 = vmatpush1.msra.mxu0 0.0
  %1100 = vmatprep.subr.mxu0 0.0
  %1101 = vmatpush1.msra.mxu0 0.0
  %1102 = vmatprep.subr.mxu0 0.0
  %1103 = vmatpush1.msra.mxu0 0.0
  %1104 = vmatprep.subr.mxu0 0.0
  %1105 = vmatpush1.msra.mxu0 0.0
  %1106 = vmatprep.mubr.f32.mxu0 0.0
  %1107 = vmatmul.mubr.f32.gmra.mrb[0].mxu0 %v965
  %v1108 = vpop.f32.mrb[0].mxu0
  %v1109 = vadd.f32 0.0, %v1108
  %v1110 = vpop.f32.mrb[0].mxu0
  %v1111 = vadd.f32 0.0, %v1110
  %1112 = vdwg.mxu0
  %v1113 = vadd.f32 %v967, %v1038
  %v1114 = vadd.f32 %v968, %v1040
  %v1115 = vadd.f32 %v969, %v1109
  %v1116 = vadd.f32 %v970, %v1111
  %v1117 = vxor.u32 %v1113, 2147483648
  %v1118 = vmul.f32 %v1117, 1.442695
  %v1119 = vpow.pop %v1118
  %v1120 = vadd.f32 %v1119, 1.0
  %v1121 = vrcp.pop %v1120
  %v1122 = vmul.f32 1.0, %v1121
  %v1123 = vxor.u32 %v1114, 2147483648
  %v1124 = vmul.f32 %v1123, 1.442695
  %v1125 = vpow.pop %v1124
  %v1126 = vadd.f32 %v1125, 1.0
  %v1127 = vrcp.pop %v1126
  %v1128 = vmul.f32 1.0, %v1127
  %v1129 = vtanh.pop %v1115
  %v1130 = vxor.u32 %v1116, 2147483648
  %v1131 = vmul.f32 %v1130, 1.442695
  %v1132 = vpow.pop %v1131
  %v1133 = vadd.f32 %v1132, 1.0
  %v1134 = vrcp.pop %v1133
  %v1135 = vmul.f32 1.0, %v1134
  %v1136 = vmul.f32 %v1128, %v963
  %v1137 = vmul.f32 %v1122, %v1129
  %v1138 = vadd.f32 %v1136, %v1137
  %v1139 = vtanh.pop %v1138
  %v1140 = vmul.f32 %v1135, %v1139
  %s1141 = scalar_lea.vmem %s0, 192
  %v1142 = vld [vmem:[%s1141] sm:$0xff]
  %v1143 = vld [vmem:[%s1141 + $0x8] sm:$0xff]
  %v1144 = vld [vmem:[%s1141 + $0x10] sm:$0xff]
  %v1145 = vld [vmem:[%s1141 + $0x18] sm:$0xff]
  %1146 = vmatprep.subr.mxu0 %v27
  %1147 = vmatpush1.msra.mxu0 %v26
  %1148 = vmatprep.subr.mxu0 %v31
  %1149 = vmatpush1.msra.mxu0 %v30
  %1150 = vmatprep.subr.mxu0 %v35
  %1151 = vmatpush1.msra.mxu0 %v34
  %1152 = vmatprep.subr.mxu0 %v39
  %1153 = vmatpush1.msra.mxu0 %v38
  %1154 = vmatprep.subr.mxu0 %v43
  %1155 = vmatpush1.msra.mxu0 %v42
  %1156 = vmatprep.subr.mxu0 %v47
  %1157 = vmatpush1.msra.mxu0 %v46
  %1158 = vmatprep.subr.mxu0 %v51
  %1159 = vmatpush1.msra.mxu0 %v50
  %1160 = vmatprep.subr.mxu0 %v55
  %1161 = vmatpush1.msra.mxu0 %v54
  %1162 = vmatprep.subr.mxu0 %v59
  %1163 = vmatpush1.msra.mxu0 %v58
  %1164 = vmatprep.subr.mxu0 %v63
  %1165 = vmatpush1.msra.mxu0 %v62
  %1166 = vmatprep.subr.mxu0 %v67
  %1167 = vmatpush1.msra.mxu0 %v66
  %1168 = vmatprep.subr.mxu0 %v71
  %1169 = vmatpush1.msra.mxu0 %v70
  %1170 = vmatprep.subr.mxu0 %v75
  %1171 = vmatpush1.msra.mxu0 %v74
  %1172 = vmatprep.subr.mxu0 %v79
  %1173 = vmatpush1.msra.mxu0 %v78
  %1174 = vmatprep.subr.mxu0 %v83
  %1175 = vmatpush1.msra.mxu0 %v82
  %1176 = vmatprep.subr.mxu0 %v87
  %1177 = vmatpush1.msra.mxu0 %v86
  %1178 = vmatprep.subr.mxu0 0.0
  %1179 = vmatpush1.msra.mxu0 0.0
  %1180 = vmatprep.subr.mxu0 0.0
  %1181 = vmatpush1.msra.mxu0 0.0
  %1182 = vmatprep.subr.mxu0 0.0
  %1183 = vmatpush1.msra.mxu0 0.0
  %1184 = vmatprep.subr.mxu0 0.0
  %1185 = vmatpush1.msra.mxu0 0.0
  %1186 = vmatprep.subr.mxu0 0.0
  %1187 = vmatpush1.msra.mxu0 0.0
  %1188 = vmatprep.subr.mxu0 0.0
  %1189 = vmatpush1.msra.mxu0 0.0
  %1190 = vmatprep.subr.mxu0 0.0
  %1191 = vmatpush1.msra.mxu0 0.0
  %1192 = vmatprep.subr.mxu0 0.0
  %1193 = vmatpush1.msra.mxu0 0.0
  %1194 = vmatprep.subr.mxu0 0.0
  %1195 = vmatpush1.msra.mxu0 0.0
  %1196 = vmatprep.subr.mxu0 0.0
  %1197 = vmatpush1.msra.mxu0 0.0
  %1198 = vmatprep.subr.mxu0 0.0
  %1199 = vmatpush1.msra.mxu0 0.0
  %1200 = vmatprep.subr.mxu0 0.0
  %1201 = vmatpush1.msra.mxu0 0.0
  %1202 = vmatprep.subr.mxu0 0.0
  %1203 = vmatpush1.msra.mxu0 0.0
  %1204 = vmatprep.subr.mxu0 0.0
  %1205 = vmatpush1.msra.mxu0 0.0
  %1206 = vmatprep.subr.mxu0 0.0
  %1207 = vmatpush1.msra.mxu0 0.0
  %1208 = vmatprep.subr.mxu0 0.0
  %1209 = vmatpush1.msra.mxu0 0.0
  %1210 = vmatprep.mubr.f32.mxu0 0.0
  %1211 = vmatmul.mubr.f32.gmra.mrb[0].mxu0 %v1140
  %v1212 = vpop.f32.mrb[0].mxu0
  %v1213 = vadd.f32 0.0, %v1212
  %v1214 = vpop.f32.mrb[0].mxu0
  %v1215 = vadd.f32 0.0, %v1214
  %1216 = vdwg.mxu0
  %1217 = vmatprep.subr.mxu0 %v29
  %1218 = vmatpush1.msra.mxu0 %v28
  %1219 = vmatprep.subr.mxu0 %v33
  %1220 = vmatpush1.msra.mxu0 %v32
  %1221 = vmatprep.subr.mxu0 %v37
  %1222 = vmatpush1.msra.mxu0 %v36
  %1223 = vmatprep.subr.mxu0 %v41
  %1224 = vmatpush1.msra.mxu0 %v40
  %1225 = vmatprep.subr.mxu0 %v45
  %1226 = vmatpush1.msra.mxu0 %v44
  %1227 = vmatprep.subr.mxu0 %v49
  %1228 = vmatpush1.msra.mxu0 %v48
  %1229 = vmatprep.subr.mxu0 %v53
  %1230 = vmatpush1.msra.mxu0 %v52
  %1231 = vmatprep.subr.mxu0 %v57
  %1232 = vmatpush1.msra.mxu0 %v56
  %1233 = vmatprep.subr.mxu0 %v61
  %1234 = vmatpush1.msra.mxu0 %v60
  %1235 = vmatprep.subr.mxu0 %v65
  %1236 = vmatpush1.msra.mxu0 %v64
  %1237 = vmatprep.subr.mxu0 %v69
  %1238 = vmatpush1.msra.mxu0 %v68
  %1239 = vmatprep.subr.mxu0 %v73
  %1240 = vmatpush1.msra.mxu0 %v72
  %1241 = vmatprep.subr.mxu0 %v77
  %1242 = vmatpush1.msra.mxu0 %v76
  %1243 = vmatprep.subr.mxu0 %v81
  %1244 = vmatpush1.msra.mxu0 %v80
  %1245 = vmatprep.subr.mxu0 %v85
  %1246 = vmatpush1.msra.mxu0 %v84
  %1247 = vmatprep.subr.mxu0 %v89
  %1248 = vmatpush1.msra.mxu0 %v88
  %1249 = vmatprep.subr.mxu0 0.0
  %1250 = vmatpush1.msra.mxu0 0.0
  %1251 = vmatprep.subr.mxu0 0.0
  %1252 = vmatpush1.msra.mxu0 0.0
  %1253 = vmatprep.subr.mxu0 0.0
  %1254 = vmatpush1.msra.mxu0 0.0
  %1255 = vmatprep.subr.mxu0 0.0
  %1256 = vmatpush1.msra.mxu0 0.0
  %1257 = vmatprep.subr.mxu0 0.0
  %1258 = vmatpush1.msra.mxu0 0.0
  %1259 = vmatprep.subr.mxu0 0.0
  %1260 = vmatpush1.msra.mxu0 0.0
  %1261 = vmatprep.subr.mxu0 0.0
  %1262 = vmatpush1.msra.mxu0 0.0
  %1263 = vmatprep.subr.mxu0 0.0
  %1264 = vmatpush1.msra.mxu0 0.0
  %1265 = vmatprep.subr.mxu0 0.0
  %1266 = vmatpush1.msra.mxu0 0.0
  %1267 = vmatprep.subr.mxu0 0.0
  %1268 = vmatpush1.msra.mxu0 0.0
  %1269 = vmatprep.subr.mxu0 0.0
  %1270 = vmatpush1.msra.mxu0 0.0
  %1271 = vmatprep.subr.mxu0 0.0
  %1272 = vmatpush1.msra.mxu0 0.0
  %1273 = vmatprep.subr.mxu0 0.0
  %1274 = vmatpush1.msra.mxu0 0.0
  %1275 = vmatprep.subr.mxu0 0.0
  %1276 = vmatpush1.msra.mxu0 0.0
  %1277 = vmatprep.subr.mxu0 0.0
  %1278 = vmatpush1.msra.mxu0 0.0
  %1279 = vmatprep.subr.mxu0 0.0
  %1280 = vmatpush1.msra.mxu0 0.0
  %1281 = vmatprep.mubr.f32.mxu0 0.0
  %1282 = vmatmul.mubr.f32.gmra.mrb[0].mxu0 %v1140
  %v1283 = vpop.f32.mrb[0].mxu0
  %v1284 = vadd.f32 0.0, %v1283
  %v1285 = vpop.f32.mrb[0].mxu0
  %v1286 = vadd.f32 0.0, %v1285
  %1287 = vdwg.mxu0
  %v1288 = vadd.f32 %v1142, %v1213
  %v1289 = vadd.f32 %v1143, %v1215
  %v1290 = vadd.f32 %v1144, %v1284
  %v1291 = vadd.f32 %v1145, %v1286
  %v1292 = vxor.u32 %v1288, 2147483648
  %v1293 = vmul.f32 %v1292, 1.442695
  %v1294 = vpow.pop %v1293
  %v1295 = vadd.f32 %v1294, 1.0
  %v1296 = vrcp.pop %v1295
  %v1297 = vmul.f32 1.0, %v1296
  %v1298 = vxor.u32 %v1289, 2147483648
  %v1299 = vmul.f32 %v1298, 1.442695
  %v1300 = vpow.pop %v1299
  %v1301 = vadd.f32 %v1300, 1.0
  %v1302 = vrcp.pop %v1301
  %v1303 = vmul.f32 1.0, %v1302
  %v1304 = vtanh.pop %v1290
  %v1305 = vxor.u32 %v1291, 2147483648
  %v1306 = vmul.f32 %v1305, 1.442695
  %v1307 = vpow.pop %v1306
  %v1308 = vadd.f32 %v1307, 1.0
  %v1309 = vrcp.pop %v1308
  %v1310 = vmul.f32 1.0, %v1309
  %v1311 = vmul.f32 %v1303, %v1138
  %v1312 = vmul.f32 %v1297, %v1304
  %v1313 = vadd.f32 %v1311, %v1312
  %v1314 = vtanh.pop %v1313
  %v1315 = vmul.f32 %v1310, %v1314
  %s1316 = scalar_lea.vmem %s0, 224
  %v1317 = vld [vmem:[%s1316] sm:$0xff]
  %v1318 = vld [vmem:[%s1316 + $0x8] sm:$0xff]
  %v1319 = vld [vmem:[%s1316 + $0x10] sm:$0xff]
  %v1320 = vld [vmem:[%s1316 + $0x18] sm:$0xff]
  %1321 = vmatprep.subr.mxu0 %v27
  %1322 = vmatpush1.msra.mxu0 %v26
  %1323 = vmatprep.subr.mxu0 %v31
  %1324 = vmatpush1.msra.mxu0 %v30
  %1325 = vmatprep.subr.mxu0 %v35
  %1326 = vmatpush1.msra.mxu0 %v34
  %1327 = vmatprep.subr.mxu0 %v39
  %1328 = vmatpush1.msra.mxu0 %v38
  %1329 = vmatprep.subr.mxu0 %v43
  %1330 = vmatpush1.msra.mxu0 %v42
  %1331 = vmatprep.subr.mxu0 %v47
  %1332 = vmatpush1.msra.mxu0 %v46
  %1333 = vmatprep.subr.mxu0 %v51
  %1334 = vmatpush1.msra.mxu0 %v50
  %1335 = vmatprep.subr.mxu0 %v55
  %1336 = vmatpush1.msra.mxu0 %v54
  %1337 = vmatprep.subr.mxu0 %v59
  %1338 = vmatpush1.msra.mxu0 %v58
  %1339 = vmatprep.subr.mxu0 %v63
  %1340 = vmatpush1.msra.mxu0 %v62
  %1341 = vmatprep.subr.mxu0 %v67
  %1342 = vmatpush1.msra.mxu0 %v66
  %1343 = vmatprep.subr.mxu0 %v71
  %1344 = vmatpush1.msra.mxu0 %v70
  %1345 = vmatprep.subr.mxu0 %v75
  %1346 = vmatpush1.msra.mxu0 %v74
  %1347 = vmatprep.subr.mxu0 %v79
  %1348 = vmatpush1.msra.mxu0 %v78
  %1349 = vmatprep.subr.mxu0 %v83
  %1350 = vmatpush1.msra.mxu0 %v82
  %1351 = vmatprep.subr.mxu0 %v87
  %1352 = vmatpush1.msra.mxu0 %v86
  %1353 = vmatprep.subr.mxu0 0.0
  %1354 = vmatpush1.msra.mxu0 0.0
  %1355 = vmatprep.subr.mxu0 0.0
  %1356 = vmatpush1.msra.mxu0 0.0
  %1357 = vmatprep.subr.mxu0 0.0
  %1358 = vmatpush1.msra.mxu0 0.0
  %1359 = vmatprep.subr.mxu0 0.0
  %1360 = vmatpush1.msra.mxu0 0.0
  %1361 = vmatprep.subr.mxu0 0.0
  %1362 = vmatpush1.msra.mxu0 0.0
  %1363 = vmatprep.subr.mxu0 0.0
  %1364 = vmatpush1.msra.mxu0 0.0
  %1365 = vmatprep.subr.mxu0 0.0
  %1366 = vmatpush1.msra.mxu0 0.0
  %1367 = vmatprep.subr.mxu0 0.0
  %1368 = vmatpush1.msra.mxu0 0.0
  %1369 = vmatprep.subr.mxu0 0.0
  %1370 = vmatpush1.msra.mxu0 0.0
  %1371 = vmatprep.subr.mxu0 0.0
  %1372 = vmatpush1.msra.mxu0 0.0
  %1373 = vmatprep.subr.mxu0 0.0
  %1374 = vmatpush1.msra.mxu0 0.0
  %1375 = vmatprep.subr.mxu0 0.0
  %1376 = vmatpush1.msra.mxu0 0.0
  %1377 = vmatprep.subr.mxu0 0.0
  %1378 = vmatpush1.msra.mxu0 0.0
  %1379 = vmatprep.subr.mxu0 0.0
  %1380 = vmatpush1.msra.mxu0 0.0
  %1381 = vmatprep.subr.mxu0 0.0
  %1382 = vmatpush1.msra.mxu0 0.0
  %1383 = vmatprep.subr.mxu0 0.0
  %1384 = vmatpush1.msra.mxu0 0.0
  %1385 = vmatprep.mubr.f32.mxu0 0.0
  %1386 = vmatmul.mubr.f32.gmra.mrb[0].mxu0 %v1315
  %v1387 = vpop.f32.mrb[0].mxu0
  %v1388 = vadd.f32 0.0, %v1387
  %v1389 = vpop.f32.mrb[0].mxu0
  %v1390 = vadd.f32 0.0, %v1389
  %1391 = vdwg.mxu0
  %1392 = vmatprep.subr.mxu0 %v29
  %1393 = vmatpush1.msra.mxu0 %v28
  %1394 = vmatprep.subr.mxu0 %v33
  %1395 = vmatpush1.msra.mxu0 %v32
  %1396 = vmatprep.subr.mxu0 %v37
  %1397 = vmatpush1.msra.mxu0 %v36
  %1398 = vmatprep.subr.mxu0 %v41
  %1399 = vmatpush1.msra.mxu0 %v40
  %1400 = vmatprep.subr.mxu0 %v45
  %1401 = vmatpush1.msra.mxu0 %v44
  %1402 = vmatprep.subr.mxu0 %v49
  %1403 = vmatpush1.msra.mxu0 %v48
  %1404 = vmatprep.subr.mxu0 %v53
  %1405 = vmatpush1.msra.mxu0 %v52
  %1406 = vmatprep.subr.mxu0 %v57
  %1407 = vmatpush1.msra.mxu0 %v56
  %1408 = vmatprep.subr.mxu0 %v61
  %1409 = vmatpush1.msra.mxu0 %v60
  %1410 = vmatprep.subr.mxu0 %v65
  %1411 = vmatpush1.msra.mxu0 %v64
  %1412 = vmatprep.subr.mxu0 %v69
  %1413 = vmatpush1.msra.mxu0 %v68
  %1414 = vmatprep.subr.mxu0 %v73
  %1415 = vmatpush1.msra.mxu0 %v72
  %1416 = vmatprep.subr.mxu0 %v77
  %1417 = vmatpush1.msra.mxu0 %v76
  %1418 = vmatprep.subr.mxu0 %v81
  %1419 = vmatpush1.msra.mxu0 %v80
  %1420 = vmatprep.subr.mxu0 %v85
  %1421 = vmatpush1.msra.mxu0 %v84
  %1422 = vmatprep.subr.mxu0 %v89
  %1423 = vmatpush1.msra.mxu0 %v88
  %1424 = vmatprep.subr.mxu0 0.0
  %1425 = vmatpush1.msra.mxu0 0.0
  %1426 = vmatprep.subr.mxu0 0.0
  %1427 = vmatpush1.msra.mxu0 0.0
  %1428 = vmatprep.subr.mxu0 0.0
  %1429 = vmatpush1.msra.mxu0 0.0
  %1430 = vmatprep.subr.mxu0 0.0
  %1431 = vmatpush1.msra.mxu0 0.0
  %1432 = vmatprep.subr.mxu0 0.0
  %1433 = vmatpush1.msra.mxu0 0.0
  %1434 = vmatprep.subr.mxu0 0.0
  %1435 = vmatpush1.msra.mxu0 0.0
  %1436 = vmatprep.subr.mxu0 0.0
  %1437 = vmatpush1.msra.mxu0 0.0
  %1438 = vmatprep.subr.mxu0 0.0
  %1439 = vmatpush1.msra.mxu0 0.0
  %1440 = vmatprep.subr.mxu0 0.0
  %1441 = vmatpush1.msra.mxu0 0.0
  %1442 = vmatprep.subr.mxu0 0.0
  %1443 = vmatpush1.msra.mxu0 0.0
  %1444 = vmatprep.subr.mxu0 0.0
  %1445 = vmatpush1.msra.mxu0 0.0
  %1446 = vmatprep.subr.mxu0 0.0
  %1447 = vmatpush1.msra.mxu0 0.0
  %1448 = vmatprep.subr.mxu0 0.0
  %1449 = vmatpush1.msra.mxu0 0.0
  %1450 = vmatprep.subr.mxu0 0.0
  %1451 = vmatpush1.msra.mxu0 0.0
  %1452 = vmatprep.subr.mxu0 0.0
  %1453 = vmatpush1.msra.mxu0 0.0
  %1454 = vmatprep.subr.mxu0 0.0
  %1455 = vmatpush1.msra.mxu0 0.0
  %1456 = vmatprep.mubr.f32.mxu0 0.0
  %1457 = vmatmul.mubr.f32.gmra.mrb[0].mxu0 %v1315
  %v1458 = vpop.f32.mrb[0].mxu0
  %v1459 = vadd.f32 0.0, %v1458
  %v1460 = vpop.f32.mrb[0].mxu0
  %v1461 = vadd.f32 0.0, %v1460
  %1462 = vdwg.mxu0
  %v1463 = vadd.f32 %v1317, %v1388
  %v1464 = vadd.f32 %v1318, %v1390
  %v1465 = vadd.f32 %v1319, %v1459
  %v1466 = vadd.f32 %v1320, %v1461
  %v1467 = vxor.u32 %v1463, 2147483648
  %v1468 = vmul.f32 %v1467, 1.442695
  %v1469 = vpow.pop %v1468
  %v1470 = vadd.f32 %v1469, 1.0
  %v1471 = vrcp.pop %v1470
  %v1472 = vmul.f32 1.0, %v1471
  %v1473 = vxor.u32 %v1464, 2147483648
  %v1474 = vmul.f32 %v1473, 1.442695
  %v1475 = vpow.pop %v1474
  %v1476 = vadd.f32 %v1475, 1.0
  %v1477 = vrcp.pop %v1476
  %v1478 = vmul.f32 1.0, %v1477
  %v1479 = vtanh.pop %v1465
  %v1480 = vxor.u32 %v1466, 2147483648
  %v1481 = vmul.f32 %v1480, 1.442695
  %v1482 = vpow.pop %v1481
  %v1483 = vadd.f32 %v1482, 1.0
  %v1484 = vrcp.pop %v1483
  %v1485 = vmul.f32 1.0, %v1484
  %v1486 = vmul.f32 %v1478, %v1313
  %v1487 = vmul.f32 %v1472, %v1479
  %v1488 = vadd.f32 %v1486, %v1487
  %v1489 = vtanh.pop %v1488
  %v1490 = vmul.f32 %v1485, %v1489
  %1491 = vst [vmem:[%s7] sm:$0xff] %v1490
  %1492 = vst [vmem:[%s8] sm:$0xff] %v1488
  %v1493 = vld [vmem:[%s4] sm:$0xff]
  %v1494 = vld [vmem:[%s4 + $0x8] sm:$0xff]
  %v1495 = vld [vmem:[%s4 + $0x10] sm:$0xff]
  %v1496 = vld [vmem:[%s4 + $0x18] sm:$0xff]
  %v1497 = vld [vmem:[%s4 + $0x20] sm:$0xff]
  %v1498 = vld [vmem:[%s4 + $0x28] sm:$0xff]
  %v1499 = vld [vmem:[%s4 + $0x30] sm:$0xff]
  %v1500 = vld [vmem:[%s4 + $0x38] sm:$0xff]
  %v1501 = vld [vmem:[%s4 + $0x40] sm:$0xff]
  %v1502 = vld [vmem:[%s4 + $0x48] sm:$0xff]
  %v1503 = vld [vmem:[%s4 + $0x50] sm:$0xff]
  %v1504 = vld [vmem:[%s4 + $0x58] sm:$0xff]
  %v1505 = vld [vmem:[%s4 + $0x60] sm:$0xff]
  %v1506 = vld [vmem:[%s4 + $0x68] sm:$0xff]
  %v1507 = vld [vmem:[%s4 + $0x70] sm:$0xff]
  %v1508 = vld [vmem:[%s4 + $0x78] sm:$0xff]
  %v1509 = vld [vmem:[%s5] sm:$0x1]
  %v1511 = vlaneseq
  %v1512 = vshrl.u32 %v1511, 7
  %v1513 = vsub.s32 0, %v1512
  %v1514 = vrot.slane %v1509, %v1513
  %1516 = vmatprep.subr.mxu0 0.0
  %1517 = vmatpush1.msra.mxu0 %v1493
  %1518 = vmatprep.subr.mxu0 0.0
  %1519 = vmatpush1.msra.mxu0 %v1494
  %1520 = vmatprep.subr.mxu0 0.0
  %1521 = vmatpush1.msra.mxu0 %v1495
  %1522 = vmatprep.subr.mxu0 0.0
  %1523 = vmatpush1.msra.mxu0 %v1496
  %1524 = vmatprep.subr.mxu0 0.0
  %1525 = vmatpush1.msra.mxu0 %v1497
  %1526 = vmatprep.subr.mxu0 0.0
  %1527 = vmatpush1.msra.mxu0 %v1498
  %1528 = vmatprep.subr.mxu0 0.0
  %1529 = vmatpush1.msra.mxu0 %v1499
  %1530 = vmatprep.subr.mxu0 0.0
  %1531 = vmatpush1.msra.mxu0 %v1500
  %1532 = vmatprep.subr.mxu0 0.0
  %1533 = vmatpush1.msra.mxu0 %v1501
  %1534 = vmatprep.subr.mxu0 0.0
  %1535 = vmatpush1.msra.mxu0 %v1502
  %1536 = vmatprep.subr.mxu0 0.0
  %1537 = vmatpush1.msra.mxu0 %v1503
  %1538 = vmatprep.subr.mxu0 0.0
  %1539 = vmatpush1.msra.mxu0 %v1504
  %1540 = vmatprep.subr.mxu0 0.0
  %1541 = vmatpush1.msra.mxu0 %v1505
  %1542 = vmatprep.subr.mxu0 0.0
  %1543 = vmatpush1.msra.mxu0 %v1506
  %1544 = vmatprep.subr.mxu0 0.0
  %1545 = vmatpush1.msra.mxu0 %v1507
  %1546 = vmatprep.subr.mxu0 0.0
  %1547 = vmatpush1.msra.mxu0 %v1508
  %1548 = vmatprep.subr.mxu0 0.0
  %1549 = vmatpush1.msra.mxu0 0.0
  %1550 = vmatprep.subr.mxu0 0.0
  %1551 = vmatpush1.msra.mxu0 0.0
  %1552 = vmatprep.subr.mxu0 0.0
  %1553 = vmatpush1.msra.mxu0 0.0
  %1554 = vmatprep.subr.mxu0 0.0
  %1555 = vmatpush1.msra.mxu0 0.0
  %1556 = vmatprep.subr.mxu0 0.0
  %1557 = vmatpush1.msra.mxu0 0.0
  %1558 = vmatprep.subr.mxu0 0.0
  %1559 = vmatpush1.msra.mxu0 0.0
  %1560 = vmatprep.subr.mxu0 0.0
  %1561 = vmatpush1.msra.mxu0 0.0
  %1562 = vmatprep.subr.mxu0 0.0
  %1563 = vmatpush1.msra.mxu0 0.0
  %1564 = vmatprep.subr.mxu0 0.0
  %1565 = vmatpush1.msra.mxu0 0.0
  %1566 = vmatprep.subr.mxu0 0.0
  %1567 = vmatpush1.msra.mxu0 0.0
  %1568 = vmatprep.subr.mxu0 0.0
  %1569 = vmatpush1.msra.mxu0 0.0
  %1570 = vmatprep.subr.mxu0 0.0
  %1571 = vmatpush1.msra.mxu0 0.0
  %1572 = vmatprep.subr.mxu0 0.0
  %1573 = vmatpush1.msra.mxu0 0.0
  %1574 = vmatprep.subr.mxu0 0.0
  %1575 = vmatpush1.msra.mxu0 0.0
  %1576 = vmatprep.subr.mxu0 0.0
  %1577 = vmatpush1.msra.mxu0 0.0
  %1578 = vmatprep.subr.mxu0 0.0
  %1579 = vmatpush1.msra.mxu0 0.0
  %1580 = vmatprep.mubr.f32.mxu0 0.0
  %1581 = vmatmul.mubr.f32.gmra.mrb[0].mxu0 %v1490
  %v1582 = vpop.f32.mrb[0].mxu0
  %v1583 = vadd.f32 %v1514, %v1582
  %v1584 = vpop.f32.mrb[0].mxu0
  %1585 = vdwg.mxu0
  %1586 = vst [vmem:[%s6] sm:$0xff] %v1583
  // Predicated region
  $region26: #{char_lstm_forward.1} parent=0 // pred_check
    _
  $region27: #{char_lstm_forward.1} parent=0 // pred_check_branch
    %1588 = sbr.rel (0) target = $region29
  $region28: #{char_lstm_forward.1} parent=0 // pred_region
    _
  $region29: #{char_lstm_forward.1} parent=0 // pred_fallthru
    _
  // Predicated region
  $region30: #{char_lstm_forward.1} parent=0 // pred_check
    _
  $region31: #{char_lstm_forward.1} parent=0 // pred_check_branch
    %1590 = sbr.rel (0) target = $region33
  $region32: #{char_lstm_forward.1} parent=0 // pred_region
    _
  $region33: #{char_lstm_forward.1} parent=0 // pred_fallthru
    _
  // Predicated region
  $region34: #{char_lstm_forward.1} parent=0 // pred_check
    _
  $region35: #{char_lstm_forward.1} parent=0 // pred_check_branch
    %1592 = sbr.rel (0) target = $region37
  $region36: #{char_lstm_forward.1} parent=0 // pred_region
    _
  $region37: #{char_lstm_forward.1} parent=0 // pred_fallthru
    _
  // Predicated region
  $region38: #{char_lstm_forward.1} parent=0 // pred_check
    _
  $region39: #{char_lstm_forward.1} parent=0 // pred_check_branch
    %1594 = sbr.rel (0) target = $region41
  $region40: #{char_lstm_forward.1} parent=0 // pred_region
    _
  $region41: #{char_lstm_forward.1} parent=0 // pred_fallthru
    _
  // Predicated region
  $region42: #{char_lstm_forward.1} parent=0 // pred_check
    _
  $region43: #{char_lstm_forward.1} parent=0 // pred_check_branch
    %1596 = sbr.rel (0) target = $region45
  $region44: #{char_lstm_forward.1} parent=0 // pred_region
    _
  $region45: #{char_lstm_forward.1} parent=0 // pred_fallthru
    _
  // Predicated region
  $region46: #{char_lstm_forward.1} parent=0 // pred_check
    _
  $region47: #{char_lstm_forward.1} parent=0 // pred_check_branch
    %1598 = sbr.rel (0) target = $region49
  $region48: #{char_lstm_forward.1} parent=0 // pred_region
    _
  $region49: #{char_lstm_forward.1} parent=0 // pred_fallthru
    _

</llo_original>
